<compile_context>
chip_gen: v7x
topology: tpu7x:2x2x1
jax: 0.10.0
libtpu: 0.0.40
codegen_flags: <defaults>
</compile_context>

<pallas_src>
import math

import jax
import jax.numpy as jnp
from jax.experimental import pallas as pl
from jax.experimental.pallas import tpu as pltpu


# ----------------------------------------------------------------------------
# Model hyper-parameters (synthetic encoder)
# ----------------------------------------------------------------------------
LORA_R = 4
LORA_ALPHA = 4
SCALING = LORA_ALPHA / LORA_R

D_MODEL = 32
N_HEADS = 4
D_HEAD = D_MODEL // N_HEADS
MLP_HIDDEN = 4 * D_MODEL
PATCH = 8
NECK_DIM = 256

PIXEL_MEAN = jnp.array([123.675, 116.28, 103.53], jnp.float32)
PIXEL_STD = jnp.array([58.395, 57.12, 57.375], jnp.float32)


# ----------------------------------------------------------------------------
# Fused Pallas kernel: one grid step per batch element
# ----------------------------------------------------------------------------

def _layernorm(x, g, b, eps=1e-5):
    mu = jnp.mean(x, axis=-1, keepdims=True)
    xc = x - mu
    var = jnp.mean(xc * xc, axis=-1, keepdims=True)
    return xc * jax.lax.rsqrt(var + eps) * g + b


def _fused_forward_kernel(
    x_ref,                      # (1, T, PD) f32 raw patches (preprocess folded in)
    wpe_ref, bpe_ref,           # (PD, D) bf16 , (1, D) f32
    g1_ref, b1_ref,             # (1, D) f32
    wqkv_ref, bqkv_ref,         # (D, 3D) bf16 , (1, 3D) f32
    wproj_ref, bproj_ref,       # (D, D) bf16 , (1, D) f32
    g2_ref, b2_ref,             # (1, D) f32
    wfc1_ref, bfc1_ref,         # (D, H) bf16 , (1, H) f32
    wfc2_ref, bfc2_ref,         # (H, D) bf16 , (1, D) f32
    whead_ref, bhead_ref,       # (1, D) f32 , (1, 1) f32   (neck+head collapsed)
    o_ref,                      # (1, 1, T) f32
):
    f32 = jnp.float32
    bf16 = jnp.bfloat16

    def dense(h, w_ref, b_ref):
        # bf16 MXU matmul, f32 accumulation, f32 bias add.
        return (jnp.dot(h.astype(bf16), w_ref[...],
                        preferred_element_type=f32) + b_ref[...])

    x = x_ref[0]                                       # (T, PD)
    tok = dense(x, wpe_ref, bpe_ref)                   # (T, D)

    # --- attention block (LoRA already folded into wqkv / wproj) ------------
    h = _layernorm(tok, g1_ref[...], b1_ref[...])
    qkv = dense(h, wqkv_ref, bqkv_ref)                 # (T, 3D)
    q = qkv[:, :D_MODEL]
    k = qkv[:, D_MODEL:2 * D_MODEL]
    v = qkv[:, 2 * D_MODEL:]

    inv_sqrt_dh = 1.0 / math.sqrt(D_HEAD)
    attn = jnp.zeros(tok.shape, f32)
    for hd in range(N_HEADS):
        lo = hd * D_HEAD
        qh = q[:, lo:lo + D_HEAD]                      # (T, dh)
        kh = k[:, lo:lo + D_HEAD]
        vh = v[:, lo:lo + D_HEAD]
        s = jnp.dot(qh, kh.T, preferred_element_type=f32) * inv_sqrt_dh  # (T, T)
        s = s - jnp.max(s, axis=-1, keepdims=True)
        e = jnp.exp(s)
        p = e * pl.reciprocal(jnp.sum(e, axis=-1, keepdims=True), approx=True)
        oh = jnp.dot(p, vh, preferred_element_type=f32)                  # (T, dh)
        # Apply the output projection per head (rows lo:lo+dh of Wproj) and
        # accumulate: identical to concat(heads) @ Wproj, without a lane
        # concatenate.
        attn = attn + jnp.dot(oh.astype(bf16),
                              wproj_ref[pl.ds(lo, D_HEAD), :],
                              preferred_element_type=f32)
    tok = tok + attn + bproj_ref[...]

    # --- MLP block (LoRA folded) ---------------------------------------------
    h = _layernorm(tok, g2_ref[...], b2_ref[...])
    h = dense(h, wfc1_ref, bfc1_ref)                   # (T, H)
    h = jax.nn.gelu(h, approximate=True)
    h = dense(h, wfc2_ref, bfc2_ref)                   # (T, D)
    tok = tok + h

    # --- fused neck + temp_decoder_head (1x1 conv): lane-dense (1, T) output -
    head = (jnp.dot(whead_ref[...], tok.T, preferred_element_type=f32)
            + bhead_ref[...])                          # (1, T)
    o_ref[0] = head


def fused_forward_pallas(patches, eff):
    """patches: (B, T, PD) f32 raw patch pixels. Returns (B, 1, T) head logits."""
    B, T, PD = patches.shape
    D, H = D_MODEL, MLP_HIDDEN

    def full2d(shape):
        return pl.BlockSpec(shape, lambda b: (0, 0))

    in_specs = [
        pl.BlockSpec((1, T, PD), lambda b: (b, 0, 0)),   # patches, per batch
        full2d((PD, D)), full2d((1, D)),                 # patch embed
        full2d((1, D)), full2d((1, D)),                  # LN1
        full2d((D, 3 * D)), full2d((1, 3 * D)),          # qkv (LoRA folded)
        full2d((D, D)), full2d((1, D)),                  # proj (LoRA folded)
        full2d((1, D)), full2d((1, D)),                  # LN2
        full2d((D, H)), full2d((1, H)),                  # fc1 (LoRA folded)
        full2d((H, D)), full2d((1, D)),                  # fc2 (LoRA folded)
        full2d((1, D)), full2d((1, 1)),                  # neck+head collapsed
    ]

    return pl.pallas_call(
        _fused_forward_kernel,
        out_shape=jax.ShapeDtypeStruct((B, 1, T), jnp.float32),
        grid=(B,),
        in_specs=in_specs,
        out_specs=pl.BlockSpec((1, 1, T), lambda b: (b, 0, 0)),
        compiler_params=pltpu.CompilerParams(
            dimension_semantics=("parallel",)),          # 2 TCs on v7x
    )(
        patches,
        eff["wpe"], eff["bpe"],
        eff["g1"], eff["b1"],
        eff["wqkv"], eff["bqkv"],
        eff["wproj"], eff["bproj"],
        eff["g2"], eff["b2"],
        eff["wfc1"], eff["bfc1"],
        eff["wfc2"], eff["bfc2"],
        eff["whead"], eff["bhead"],
    )


# ----------------------------------------------------------------------------
# Parameter construction (deterministic, synthetic) and algebraic folding
# ----------------------------------------------------------------------------

def kaiming_uniform(key, shape, fan_in):
    bound = math.sqrt(6.0 / fan_in)
    return jax.random.uniform(key, shape, jnp.float32, -bound, bound)


def make_lora_linear_params(key, in_f, out_f, r):
    k1, k2, k3 = jax.random.split(key, 3)
    w = kaiming_uniform(k1, (in_f, out_f), in_f)       # torch weight (N,K) transposed
    b = jax.random.uniform(k2, (out_f,), jnp.float32, -0.1, 0.1)
    lora_a = kaiming_uniform(k3, (in_f, r), in_f)      # torch lora_A (r,K) transposed
    lora_b = jnp.zeros((r, out_f), jnp.float32)        # PyTorch init: zeros
    return dict(w=w, b=b, a=lora_a, bm=lora_b)


def make_params(key, patch_dim):
    keys = jax.random.split(key, 8)
    p = {}
    p["patch_embed"] = dict(
        w=kaiming_uniform(keys[0], (patch_dim, D_MODEL), patch_dim),
        b=jnp.zeros((D_MODEL,), jnp.float32))
    p["ln1_g"] = jnp.ones((D_MODEL,), jnp.float32)
    p["ln1_b"] = jnp.zeros((D_MODEL,), jnp.float32)
    p["qkv"] = make_lora_linear_params(keys[1], D_MODEL, 3 * D_MODEL, LORA_R)
    p["proj"] = make_lora_linear_params(keys[2], D_MODEL, D_MODEL, LORA_R)
    p["ln2_g"] = jnp.ones((D_MODEL,), jnp.float32)
    p["ln2_b"] = jnp.zeros((D_MODEL,), jnp.float32)
    p["fc1"] = make_lora_linear_params(keys[3], D_MODEL, MLP_HIDDEN, LORA_R)
    p["fc2"] = make_lora_linear_params(keys[4], MLP_HIDDEN, D_MODEL, LORA_R)
    p["neck"] = dict(
        w=kaiming_uniform(keys[5], (D_MODEL, NECK_DIM), D_MODEL),
        b=jnp.zeros((NECK_DIM,), jnp.float32))
    # temp_decoder_head: nn.Conv2d(256, 1, kernel_size=1)
    p["head_w"] = kaiming_uniform(keys[6], (NECK_DIM, 1), NECK_DIM)    # (Cin, Cout)
    p["head_b"] = jax.random.uniform(keys[7], (1,), jnp.float32, -0.05, 0.05)
    return p


def fold_params(p):
    """Fold preprocess normalization, LoRA updates and neck+head into effective
    kernel operands (tiny XLA work, once per forward)."""
    pp = PATCH * PATCH
    # Patch feature layout is (C, P, P) flattened -> channel is the slow axis.
    mean_feat = jnp.repeat(PIXEL_MEAN, pp)             # (PD,)
    inv_std_feat = jnp.repeat(1.0 / PIXEL_STD, pp)     # (PD,)

    w_pe = p["patch_embed"]["w"]
    # ((x - m) / s) @ W + b  ==  x @ (diag(1/s) W) + (b - (m/s) @ W)
    wpe_eff = inv_std_feat[:, None] * w_pe
    bpe_eff = p["patch_embed"]["b"] - (mean_feat * inv_std_feat) @ w_pe

    def fold_lora(lp):
        # Exact: W_eff = W + scaling * (A @ B)  (B is zeros at init, as in PyTorch)
        return lp["w"] + SCALING * (lp["a"] @ lp["bm"])

    # neck + 1x1-conv head collapsed: tok @ (W_neck @ W_head) + (b_neck @ W_head + b_head)
    w_nh = p["neck"]["w"] @ p["head_w"]                # (D, 1)
    b_nh = p["neck"]["b"] @ p["head_w"] + p["head_b"]  # (1,)

    bf16 = jnp.bfloat16
    return dict(
        wpe=wpe_eff.astype(bf16), bpe=bpe_eff.reshape(1, -1),
        g1=p["ln1_g"].reshape(1, -1), b1=p["ln1_b"].reshape(1, -1),
        wqkv=fold_lora(p["qkv"]).astype(bf16), bqkv=p["qkv"]["b"].reshape(1, -1),
        wproj=fold_lora(p["proj"]).astype(bf16), bproj=p["proj"]["b"].reshape(1, -1),
        g2=p["ln2_g"].reshape(1, -1), b2=p["ln2_b"].reshape(1, -1),
        wfc1=fold_lora(p["fc1"]).astype(bf16), bfc1=p["fc1"]["b"].reshape(1, -1),
        wfc2=fold_lora(p["fc2"]).astype(bf16), bfc2=p["fc2"]["b"].reshape(1, -1),
        whead=w_nh.T,                                  # (1, D) f32
        bhead=b_nh.reshape(1, 1),
    )


# ----------------------------------------------------------------------------
# Forward pass (MobileSAM_LoRA_Adapted.forward semantics)
# ----------------------------------------------------------------------------

def forward(params, image):
    # image: NCHW float32 pixel values, shape (B, 3, H, W)
    B, C, H, W = image.shape

    # TODO(synk): SAM's preprocess also resizes/zero-pads to a 1024x1024 square;
    # inputs here are already square at the synthetic size, so only the
    # per-channel (x - mean) / std normalization applies (folded into wpe/bpe).

    # Patchify (pure layout, XLA): (B, C, H, W) -> (B, T, C*PATCH*PATCH)
    Hp, Wp = H // PATCH, W // PATCH
    T = Hp * Wp
    patches = image.reshape(B, C, Hp, PATCH, Wp, PATCH)
    patches = patches.transpose(0, 2, 4, 1, 3, 5).reshape(B, T, C * PATCH * PATCH)

    eff = fold_params(params)
    head = fused_forward_pallas(patches, eff)          # (B, 1, T) head logits
    head = head.reshape(B, 1, Hp, Wp)                  # NCHW low-res map

    # F.interpolate(..., size=image.shape[-2:], mode='bilinear', align_corners=False)
    outputs = jax.image.resize(head, (B, 1, H, W), method="bilinear")

    iou_pred = None
    return outputs, iou_pred


# ----------------------------------------------------------------------------
# main
# ----------------------------------------------------------------------------

if __name__ == "__main__":
    key = jax.random.PRNGKey(0)
    k_img, k_par = jax.random.split(key)

    B, C, H, W = 2, 3, 32, 32
    # pixel-valued image in [0, 255)
    image = jax.random.uniform(k_img, (B, C, H, W), jnp.float32, 0.0, 255.0)

    params = make_params(k_par, patch_dim=C * PATCH * PATCH)

    outputs, iou_pred = jax.jit(forward)(params, image)
    outputs = jax.block_until_ready(outputs)

    assert outputs.shape == (B, 1, H, W), outputs.shape
    assert iou_pred is None
    assert bool(jnp.all(jnp.isfinite(outputs)))
    print("KERNEL_OK")
</pallas_src>

<mosaic_0001>
module attributes {stable_mosaic.version = 11 : i64} {
  func.func @_fused_forward_kernel(%arg0: i32, %arg1: memref<1x16x192xf32, #tpu.memory_space<vmem>>, %arg2: memref<192x32xbf16, #tpu.memory_space<vmem>>, %arg3: memref<1x32xf32, #tpu.memory_space<vmem>>, %arg4: memref<1x32xf32, #tpu.memory_space<vmem>>, %arg5: memref<1x32xf32, #tpu.memory_space<vmem>>, %arg6: memref<32x96xbf16, #tpu.memory_space<vmem>>, %arg7: memref<1x96xf32, #tpu.memory_space<vmem>>, %arg8: memref<32x32xbf16, #tpu.memory_space<vmem>>, %arg9: memref<1x32xf32, #tpu.memory_space<vmem>>, %arg10: memref<1x32xf32, #tpu.memory_space<vmem>>, %arg11: memref<1x32xf32, #tpu.memory_space<vmem>>, %arg12: memref<32x128xbf16, #tpu.memory_space<vmem>>, %arg13: memref<1x128xf32, #tpu.memory_space<vmem>>, %arg14: memref<128x32xbf16, #tpu.memory_space<vmem>>, %arg15: memref<1x32xf32, #tpu.memory_space<vmem>>, %arg16: memref<1x32xf32, #tpu.memory_space<vmem>>, %arg17: memref<1x1xf32, #tpu.memory_space<vmem>>, %arg18: memref<1x1x16xf32, #tpu.memory_space<vmem>>) attributes {dimension_semantics = [#tpu.dimension_semantics<parallel>], iteration_bounds = array<i64: 2>, scalar_prefetch = 0 : i64, scratch_operands = 0 : i64, tpu.core_type = #tpu.core_type<tc>, window_params = [{transform_indices = @transform_0, window_bounds = array<i64: 1, 16, 192>}, {pipeline_mode = #tpu.pipeline_mode<synchronous>, transform_indices = @transform_1, window_bounds = array<i64: 192, 32>}, {pipeline_mode = #tpu.pipeline_mode<synchronous>, transform_indices = @transform_2, window_bounds = array<i64: 1, 32>}, {pipeline_mode = #tpu.pipeline_mode<synchronous>, transform_indices = @transform_3, window_bounds = array<i64: 1, 32>}, {pipeline_mode = #tpu.pipeline_mode<synchronous>, transform_indices = @transform_4, window_bounds = array<i64: 1, 32>}, {pipeline_mode = #tpu.pipeline_mode<synchronous>, transform_indices = @transform_5, window_bounds = array<i64: 32, 96>}, {pipeline_mode = #tpu.pipeline_mode<synchronous>, transform_indices = @transform_6, window_bounds = array<i64: 1, 96>}, {pipeline_mode = #tpu.pipeline_mode<synchronous>, transform_indices = @transform_7, window_bounds = array<i64: 32, 32>}, {pipeline_mode = #tpu.pipeline_mode<synchronous>, transform_indices = @transform_8, window_bounds = array<i64: 1, 32>}, {pipeline_mode = #tpu.pipeline_mode<synchronous>, transform_indices = @transform_9, window_bounds = array<i64: 1, 32>}, {pipeline_mode = #tpu.pipeline_mode<synchronous>, transform_indices = @transform_10, window_bounds = array<i64: 1, 32>}, {pipeline_mode = #tpu.pipeline_mode<synchronous>, transform_indices = @transform_11, window_bounds = array<i64: 32, 128>}, {pipeline_mode = #tpu.pipeline_mode<synchronous>, transform_indices = @transform_12, window_bounds = array<i64: 1, 128>}, {pipeline_mode = #tpu.pipeline_mode<synchronous>, transform_indices = @transform_13, window_bounds = array<i64: 128, 32>}, {pipeline_mode = #tpu.pipeline_mode<synchronous>, transform_indices = @transform_14, window_bounds = array<i64: 1, 32>}, {pipeline_mode = #tpu.pipeline_mode<synchronous>, transform_indices = @transform_15, window_bounds = array<i64: 1, 32>}, {pipeline_mode = #tpu.pipeline_mode<synchronous>, transform_indices = @transform_16, window_bounds = array<i64: 1, 1>}, {transform_indices = @transform_17, window_bounds = array<i64: 1, 1, 16>}]} {
    %c0 = arith.constant 0 : index
    %c0_0 = arith.constant 0 : index
    %c0_1 = arith.constant 0 : index
    %0 = vector.load %arg1[%c0, %c0_0, %c0_1] : memref<1x16x192xf32, #tpu.memory_space<vmem>>, vector<1x16x192xf32>
    %1 = vector.shape_cast %0 : vector<1x16x192xf32> to vector<16x192xf32>
    %2 = arith.truncf %1 : vector<16x192xf32> to vector<16x192xbf16>
    %c0_2 = arith.constant 0 : index
    %c0_3 = arith.constant 0 : index
    %3 = vector.load %arg2[%c0_2, %c0_3] : memref<192x32xbf16, #tpu.memory_space<vmem>>, vector<192x32xbf16>
    %cst = arith.constant dense<0.000000e+00> : vector<16x32xf32>
    %4 = tpu.matmul %2, %3, %cst {dimension_numbers = #tpu.dot_dimension_numbers<[1], [0], [0], [1], [0, 0, 1, 1], [], []>} : vector<16x192xbf16>, vector<192x32xbf16>, vector<16x32xf32> -> vector<16x32xf32>
    %c0_4 = arith.constant 0 : index
    %c0_5 = arith.constant 0 : index
    %5 = vector.load %arg3[%c0_4, %c0_5] : memref<1x32xf32, #tpu.memory_space<vmem>>, vector<1x32xf32>
    %6 = vector.broadcast %5 : vector<1x32xf32> to vector<16x32xf32>
    %7 = arith.addf %4, %6 : vector<16x32xf32>
    %c0_6 = arith.constant 0 : index
    %c0_7 = arith.constant 0 : index
    %8 = vector.load %arg4[%c0_6, %c0_7] : memref<1x32xf32, #tpu.memory_space<vmem>>, vector<1x32xf32>
    %c0_8 = arith.constant 0 : index
    %c0_9 = arith.constant 0 : index
    %9 = vector.load %arg5[%c0_8, %c0_9] : memref<1x32xf32, #tpu.memory_space<vmem>>, vector<1x32xf32>
    %cst_10 = arith.constant dense<0.000000e+00> : vector<16xf32>
    %10 = vector.multi_reduction <add>, %7, %cst_10 [1] : vector<16x32xf32> to vector<16xf32>
    %11 = vector.shape_cast %10 : vector<16xf32> to vector<16x1xf32>
    %cst_11 = arith.constant 3.200000e+01 : f32
    %12 = vector.broadcast %cst_11 : f32 to vector<16x1xf32>
    %13 = arith.divf %11, %12 : vector<16x1xf32>
    %14 = vector.broadcast %13 : vector<16x1xf32> to vector<16x32xf32>
    %15 = arith.subf %7, %14 : vector<16x32xf32>
    %16 = arith.mulf %15, %15 : vector<16x32xf32>
    %cst_12 = arith.constant dense<0.000000e+00> : vector<16xf32>
    %17 = vector.multi_reduction <add>, %16, %cst_12 [1] : vector<16x32xf32> to vector<16xf32>
    %18 = vector.shape_cast %17 : vector<16xf32> to vector<16x1xf32>
    %cst_13 = arith.constant 3.200000e+01 : f32
    %19 = vector.broadcast %cst_13 : f32 to vector<16x1xf32>
    %20 = arith.divf %18, %19 : vector<16x1xf32>
    %cst_14 = arith.constant 9.99999974E-6 : f32
    %21 = vector.broadcast %cst_14 : f32 to vector<16x1xf32>
    %22 = arith.addf %20, %21 : vector<16x1xf32>
    %23 = math.rsqrt %22 : vector<16x1xf32>
    %24 = vector.broadcast %23 : vector<16x1xf32> to vector<16x32xf32>
    %25 = arith.mulf %15, %24 : vector<16x32xf32>
    %26 = vector.broadcast %8 : vector<1x32xf32> to vector<16x32xf32>
    %27 = arith.mulf %25, %26 : vector<16x32xf32>
    %28 = vector.broadcast %9 : vector<1x32xf32> to vector<16x32xf32>
    %29 = arith.addf %27, %28 : vector<16x32xf32>
    %30 = arith.truncf %29 : vector<16x32xf32> to vector<16x32xbf16>
    %c0_15 = arith.constant 0 : index
    %c0_16 = arith.constant 0 : index
    %31 = vector.load %arg6[%c0_15, %c0_16] : memref<32x96xbf16, #tpu.memory_space<vmem>>, vector<32x96xbf16>
    %cst_17 = arith.constant dense<0.000000e+00> : vector<16x96xf32>
    %32 = tpu.matmul %30, %31, %cst_17 {dimension_numbers = #tpu.dot_dimension_numbers<[1], [0], [0], [1], [0, 0, 1, 1], [], []>} : vector<16x32xbf16>, vector<32x96xbf16>, vector<16x96xf32> -> vector<16x96xf32>
    %c0_18 = arith.constant 0 : index
    %c0_19 = arith.constant 0 : index
    %33 = vector.load %arg7[%c0_18, %c0_19] : memref<1x96xf32, #tpu.memory_space<vmem>>, vector<1x96xf32>
    %34 = vector.broadcast %33 : vector<1x96xf32> to vector<16x96xf32>
    %35 = arith.addf %32, %34 : vector<16x96xf32>
    %36 = vector.extract_strided_slice %35 {offsets = [0, 0], sizes = [16, 32], strides = [1, 1]} : vector<16x96xf32> to vector<16x32xf32>
    %37 = vector.extract_strided_slice %35 {offsets = [0, 32], sizes = [16, 32], strides = [1, 1]} : vector<16x96xf32> to vector<16x32xf32>
    %38 = vector.extract_strided_slice %35 {offsets = [0, 64], sizes = [16, 32], strides = [1, 1]} : vector<16x96xf32> to vector<16x32xf32>
    %cst_20 = arith.constant 0.000000e+00 : f32
    %39 = vector.broadcast %cst_20 : f32 to vector<16x32xf32>
    %40 = vector.extract_strided_slice %36 {offsets = [0, 0], sizes = [16, 8], strides = [1, 1]} : vector<16x32xf32> to vector<16x8xf32>
    %41 = vector.extract_strided_slice %37 {offsets = [0, 0], sizes = [16, 8], strides = [1, 1]} : vector<16x32xf32> to vector<16x8xf32>
    %42 = vector.extract_strided_slice %38 {offsets = [0, 0], sizes = [16, 8], strides = [1, 1]} : vector<16x32xf32> to vector<16x8xf32>
    %43 = tpu.transpose %41, [1, 0] : vector<16x8xf32> -> vector<8x16xf32>
    %cst_21 = arith.constant dense<0.000000e+00> : vector<16x16xf32>
    %44 = tpu.matmul %40, %43, %cst_21 {dimension_numbers = #tpu.dot_dimension_numbers<[1], [0], [0], [1], [0, 0, 1, 1], [], []>} : vector<16x8xf32>, vector<8x16xf32>, vector<16x16xf32> -> vector<16x16xf32>
    %cst_22 = arith.constant 0.353553385 : f32
    %45 = vector.broadcast %cst_22 : f32 to vector<16x16xf32>
    %46 = arith.mulf %44, %45 : vector<16x16xf32>
    %cst_23 = arith.constant dense<0xFF800000> : vector<16xf32>
    %47 = vector.multi_reduction <maximumf>, %46, %cst_23 [1] : vector<16x16xf32> to vector<16xf32>
    %48 = vector.shape_cast %47 : vector<16xf32> to vector<16x1xf32>
    %49 = vector.broadcast %48 : vector<16x1xf32> to vector<16x16xf32>
    %50 = arith.subf %46, %49 : vector<16x16xf32>
    %51 = math.exp %50 : vector<16x16xf32>
    %cst_24 = arith.constant dense<0.000000e+00> : vector<16xf32>
    %52 = vector.multi_reduction <add>, %51, %cst_24 [1] : vector<16x16xf32> to vector<16xf32>
    %53 = vector.shape_cast %52 : vector<16xf32> to vector<16x1xf32>
    %54 = tpu.reciprocal %53 {approx = true} : vector<16x1xf32> -> vector<16x1xf32>
    %55 = vector.broadcast %54 : vector<16x1xf32> to vector<16x16xf32>
    %56 = arith.mulf %51, %55 : vector<16x16xf32>
    %cst_25 = arith.constant dense<0.000000e+00> : vector<16x8xf32>
    %57 = tpu.matmul %56, %42, %cst_25 {dimension_numbers = #tpu.dot_dimension_numbers<[1], [0], [0], [1], [0, 0, 1, 1], [], []>} : vector<16x16xf32>, vector<16x8xf32>, vector<16x8xf32> -> vector<16x8xf32>
    %58 = arith.truncf %57 : vector<16x8xf32> to vector<16x8xbf16>
    %c0_26 = arith.constant 0 : index
    %c0_27 = arith.constant 0 : index
    %59 = vector.load %arg8[%c0_26, %c0_27] : memref<32x32xbf16, #tpu.memory_space<vmem>>, vector<8x32xbf16>
    %cst_28 = arith.constant dense<0.000000e+00> : vector<16x32xf32>
    %60 = tpu.matmul %58, %59, %cst_28 {dimension_numbers = #tpu.dot_dimension_numbers<[1], [0], [0], [1], [0, 0, 1, 1], [], []>} : vector<16x8xbf16>, vector<8x32xbf16>, vector<16x32xf32> -> vector<16x32xf32>
    %61 = arith.addf %39, %60 : vector<16x32xf32>
    %62 = vector.extract_strided_slice %36 {offsets = [0, 8], sizes = [16, 8], strides = [1, 1]} : vector<16x32xf32> to vector<16x8xf32>
    %63 = vector.extract_strided_slice %37 {offsets = [0, 8], sizes = [16, 8], strides = [1, 1]} : vector<16x32xf32> to vector<16x8xf32>
    %64 = vector.extract_strided_slice %38 {offsets = [0, 8], sizes = [16, 8], strides = [1, 1]} : vector<16x32xf32> to vector<16x8xf32>
    %65 = tpu.transpose %63, [1, 0] : vector<16x8xf32> -> vector<8x16xf32>
    %cst_29 = arith.constant dense<0.000000e+00> : vector<16x16xf32>
    %66 = tpu.matmul %62, %65, %cst_29 {dimension_numbers = #tpu.dot_dimension_numbers<[1], [0], [0], [1], [0, 0, 1, 1], [], []>} : vector<16x8xf32>, vector<8x16xf32>, vector<16x16xf32> -> vector<16x16xf32>
    %cst_30 = arith.constant 0.353553385 : f32
    %67 = vector.broadcast %cst_30 : f32 to vector<16x16xf32>
    %68 = arith.mulf %66, %67 : vector<16x16xf32>
    %cst_31 = arith.constant dense<0xFF800000> : vector<16xf32>
    %69 = vector.multi_reduction <maximumf>, %68, %cst_31 [1] : vector<16x16xf32> to vector<16xf32>
    %70 = vector.shape_cast %69 : vector<16xf32> to vector<16x1xf32>
    %71 = vector.broadcast %70 : vector<16x1xf32> to vector<16x16xf32>
    %72 = arith.subf %68, %71 : vector<16x16xf32>
    %73 = math.exp %72 : vector<16x16xf32>
    %cst_32 = arith.constant dense<0.000000e+00> : vector<16xf32>
    %74 = vector.multi_reduction <add>, %73, %cst_32 [1] : vector<16x16xf32> to vector<16xf32>
    %75 = vector.shape_cast %74 : vector<16xf32> to vector<16x1xf32>
    %76 = tpu.reciprocal %75 {approx = true} : vector<16x1xf32> -> vector<16x1xf32>
    %77 = vector.broadcast %76 : vector<16x1xf32> to vector<16x16xf32>
    %78 = arith.mulf %73, %77 : vector<16x16xf32>
    %cst_33 = arith.constant dense<0.000000e+00> : vector<16x8xf32>
    %79 = tpu.matmul %78, %64, %cst_33 {dimension_numbers = #tpu.dot_dimension_numbers<[1], [0], [0], [1], [0, 0, 1, 1], [], []>} : vector<16x16xf32>, vector<16x8xf32>, vector<16x8xf32> -> vector<16x8xf32>
    %80 = arith.truncf %79 : vector<16x8xf32> to vector<16x8xbf16>
    %c8 = arith.constant 8 : index
    %c0_34 = arith.constant 0 : index
    %81 = vector.load %arg8[%c8, %c0_34] : memref<32x32xbf16, #tpu.memory_space<vmem>>, vector<8x32xbf16>
    %cst_35 = arith.constant dense<0.000000e+00> : vector<16x32xf32>
    %82 = tpu.matmul %80, %81, %cst_35 {dimension_numbers = #tpu.dot_dimension_numbers<[1], [0], [0], [1], [0, 0, 1, 1], [], []>} : vector<16x8xbf16>, vector<8x32xbf16>, vector<16x32xf32> -> vector<16x32xf32>
    %83 = arith.addf %61, %82 : vector<16x32xf32>
    %84 = vector.extract_strided_slice %36 {offsets = [0, 16], sizes = [16, 8], strides = [1, 1]} : vector<16x32xf32> to vector<16x8xf32>
    %85 = vector.extract_strided_slice %37 {offsets = [0, 16], sizes = [16, 8], strides = [1, 1]} : vector<16x32xf32> to vector<16x8xf32>
    %86 = vector.extract_strided_slice %38 {offsets = [0, 16], sizes = [16, 8], strides = [1, 1]} : vector<16x32xf32> to vector<16x8xf32>
    %87 = tpu.transpose %85, [1, 0] : vector<16x8xf32> -> vector<8x16xf32>
    %cst_36 = arith.constant dense<0.000000e+00> : vector<16x16xf32>
    %88 = tpu.matmul %84, %87, %cst_36 {dimension_numbers = #tpu.dot_dimension_numbers<[1], [0], [0], [1], [0, 0, 1, 1], [], []>} : vector<16x8xf32>, vector<8x16xf32>, vector<16x16xf32> -> vector<16x16xf32>
    %cst_37 = arith.constant 0.353553385 : f32
    %89 = vector.broadcast %cst_37 : f32 to vector<16x16xf32>
    %90 = arith.mulf %88, %89 : vector<16x16xf32>
    %cst_38 = arith.constant dense<0xFF800000> : vector<16xf32>
    %91 = vector.multi_reduction <maximumf>, %90, %cst_38 [1] : vector<16x16xf32> to vector<16xf32>
    %92 = vector.shape_cast %91 : vector<16xf32> to vector<16x1xf32>
    %93 = vector.broadcast %92 : vector<16x1xf32> to vector<16x16xf32>
    %94 = arith.subf %90, %93 : vector<16x16xf32>
    %95 = math.exp %94 : vector<16x16xf32>
    %cst_39 = arith.constant dense<0.000000e+00> : vector<16xf32>
    %96 = vector.multi_reduction <add>, %95, %cst_39 [1] : vector<16x16xf32> to vector<16xf32>
    %97 = vector.shape_cast %96 : vector<16xf32> to vector<16x1xf32>
    %98 = tpu.reciprocal %97 {approx = true} : vector<16x1xf32> -> vector<16x1xf32>
    %99 = vector.broadcast %98 : vector<16x1xf32> to vector<16x16xf32>
    %100 = arith.mulf %95, %99 : vector<16x16xf32>
    %cst_40 = arith.constant dense<0.000000e+00> : vector<16x8xf32>
    %101 = tpu.matmul %100, %86, %cst_40 {dimension_numbers = #tpu.dot_dimension_numbers<[1], [0], [0], [1], [0, 0, 1, 1], [], []>} : vector<16x16xf32>, vector<16x8xf32>, vector<16x8xf32> -> vector<16x8xf32>
    %102 = arith.truncf %101 : vector<16x8xf32> to vector<16x8xbf16>
    %c16 = arith.constant 16 : index
    %c0_41 = arith.constant 0 : index
    %103 = vector.load %arg8[%c16, %c0_41] : memref<32x32xbf16, #tpu.memory_space<vmem>>, vector<8x32xbf16>
    %cst_42 = arith.constant dense<0.000000e+00> : vector<16x32xf32>
    %104 = tpu.matmul %102, %103, %cst_42 {dimension_numbers = #tpu.dot_dimension_numbers<[1], [0], [0], [1], [0, 0, 1, 1], [], []>} : vector<16x8xbf16>, vector<8x32xbf16>, vector<16x32xf32> -> vector<16x32xf32>
    %105 = arith.addf %83, %104 : vector<16x32xf32>
    %106 = vector.extract_strided_slice %36 {offsets = [0, 24], sizes = [16, 8], strides = [1, 1]} : vector<16x32xf32> to vector<16x8xf32>
    %107 = vector.extract_strided_slice %37 {offsets = [0, 24], sizes = [16, 8], strides = [1, 1]} : vector<16x32xf32> to vector<16x8xf32>
    %108 = vector.extract_strided_slice %38 {offsets = [0, 24], sizes = [16, 8], strides = [1, 1]} : vector<16x32xf32> to vector<16x8xf32>
    %109 = tpu.transpose %107, [1, 0] : vector<16x8xf32> -> vector<8x16xf32>
    %cst_43 = arith.constant dense<0.000000e+00> : vector<16x16xf32>
    %110 = tpu.matmul %106, %109, %cst_43 {dimension_numbers = #tpu.dot_dimension_numbers<[1], [0], [0], [1], [0, 0, 1, 1], [], []>} : vector<16x8xf32>, vector<8x16xf32>, vector<16x16xf32> -> vector<16x16xf32>
    %cst_44 = arith.constant 0.353553385 : f32
    %111 = vector.broadcast %cst_44 : f32 to vector<16x16xf32>
    %112 = arith.mulf %110, %111 : vector<16x16xf32>
    %cst_45 = arith.constant dense<0xFF800000> : vector<16xf32>
    %113 = vector.multi_reduction <maximumf>, %112, %cst_45 [1] : vector<16x16xf32> to vector<16xf32>
    %114 = vector.shape_cast %113 : vector<16xf32> to vector<16x1xf32>
    %115 = vector.broadcast %114 : vector<16x1xf32> to vector<16x16xf32>
    %116 = arith.subf %112, %115 : vector<16x16xf32>
    %117 = math.exp %116 : vector<16x16xf32>
    %cst_46 = arith.constant dense<0.000000e+00> : vector<16xf32>
    %118 = vector.multi_reduction <add>, %117, %cst_46 [1] : vector<16x16xf32> to vector<16xf32>
    %119 = vector.shape_cast %118 : vector<16xf32> to vector<16x1xf32>
    %120 = tpu.reciprocal %119 {approx = true} : vector<16x1xf32> -> vector<16x1xf32>
    %121 = vector.broadcast %120 : vector<16x1xf32> to vector<16x16xf32>
    %122 = arith.mulf %117, %121 : vector<16x16xf32>
    %cst_47 = arith.constant dense<0.000000e+00> : vector<16x8xf32>
    %123 = tpu.matmul %122, %108, %cst_47 {dimension_numbers = #tpu.dot_dimension_numbers<[1], [0], [0], [1], [0, 0, 1, 1], [], []>} : vector<16x16xf32>, vector<16x8xf32>, vector<16x8xf32> -> vector<16x8xf32>
    %124 = arith.truncf %123 : vector<16x8xf32> to vector<16x8xbf16>
    %c24 = arith.constant 24 : index
    %c0_48 = arith.constant 0 : index
    %125 = vector.load %arg8[%c24, %c0_48] : memref<32x32xbf16, #tpu.memory_space<vmem>>, vector<8x32xbf16>
    %cst_49 = arith.constant dense<0.000000e+00> : vector<16x32xf32>
    %126 = tpu.matmul %124, %125, %cst_49 {dimension_numbers = #tpu.dot_dimension_numbers<[1], [0], [0], [1], [0, 0, 1, 1], [], []>} : vector<16x8xbf16>, vector<8x32xbf16>, vector<16x32xf32> -> vector<16x32xf32>
    %127 = arith.addf %105, %126 : vector<16x32xf32>
    %128 = arith.addf %7, %127 : vector<16x32xf32>
    %c0_50 = arith.constant 0 : index
    %c0_51 = arith.constant 0 : index
    %129 = vector.load %arg9[%c0_50, %c0_51] : memref<1x32xf32, #tpu.memory_space<vmem>>, vector<1x32xf32>
    %130 = vector.broadcast %129 : vector<1x32xf32> to vector<16x32xf32>
    %131 = arith.addf %128, %130 : vector<16x32xf32>
    %c0_52 = arith.constant 0 : index
    %c0_53 = arith.constant 0 : index
    %132 = vector.load %arg10[%c0_52, %c0_53] : memref<1x32xf32, #tpu.memory_space<vmem>>, vector<1x32xf32>
    %c0_54 = arith.constant 0 : index
    %c0_55 = arith.constant 0 : index
    %133 = vector.load %arg11[%c0_54, %c0_55] : memref<1x32xf32, #tpu.memory_space<vmem>>, vector<1x32xf32>
    %cst_56 = arith.constant dense<0.000000e+00> : vector<16xf32>
    %134 = vector.multi_reduction <add>, %131, %cst_56 [1] : vector<16x32xf32> to vector<16xf32>
    %135 = vector.shape_cast %134 : vector<16xf32> to vector<16x1xf32>
    %cst_57 = arith.constant 3.200000e+01 : f32
    %136 = vector.broadcast %cst_57 : f32 to vector<16x1xf32>
    %137 = arith.divf %135, %136 : vector<16x1xf32>
    %138 = vector.broadcast %137 : vector<16x1xf32> to vector<16x32xf32>
    %139 = arith.subf %131, %138 : vector<16x32xf32>
    %140 = arith.mulf %139, %139 : vector<16x32xf32>
    %cst_58 = arith.constant dense<0.000000e+00> : vector<16xf32>
    %141 = vector.multi_reduction <add>, %140, %cst_58 [1] : vector<16x32xf32> to vector<16xf32>
    %142 = vector.shape_cast %141 : vector<16xf32> to vector<16x1xf32>
    %cst_59 = arith.constant 3.200000e+01 : f32
    %143 = vector.broadcast %cst_59 : f32 to vector<16x1xf32>
    %144 = arith.divf %142, %143 : vector<16x1xf32>
    %cst_60 = arith.constant 9.99999974E-6 : f32
    %145 = vector.broadcast %cst_60 : f32 to vector<16x1xf32>
    %146 = arith.addf %144, %145 : vector<16x1xf32>
    %147 = math.rsqrt %146 : vector<16x1xf32>
    %148 = vector.broadcast %147 : vector<16x1xf32> to vector<16x32xf32>
    %149 = arith.mulf %139, %148 : vector<16x32xf32>
    %150 = vector.broadcast %132 : vector<1x32xf32> to vector<16x32xf32>
    %151 = arith.mulf %149, %150 : vector<16x32xf32>
    %152 = vector.broadcast %133 : vector<1x32xf32> to vector<16x32xf32>
    %153 = arith.addf %151, %152 : vector<16x32xf32>
    %154 = arith.truncf %153 : vector<16x32xf32> to vector<16x32xbf16>
    %c0_61 = arith.constant 0 : index
    %c0_62 = arith.constant 0 : index
    %155 = vector.load %arg12[%c0_61, %c0_62] : memref<32x128xbf16, #tpu.memory_space<vmem>>, vector<32x128xbf16>
    %cst_63 = arith.constant dense<0.000000e+00> : vector<16x128xf32>
    %156 = tpu.matmul %154, %155, %cst_63 {dimension_numbers = #tpu.dot_dimension_numbers<[1], [0], [0], [1], [0, 0, 1, 1], [], []>} : vector<16x32xbf16>, vector<32x128xbf16>, vector<16x128xf32> -> vector<16x128xf32>
    %c0_64 = arith.constant 0 : index
    %c0_65 = arith.constant 0 : index
    %157 = vector.load %arg13[%c0_64, %c0_65] : memref<1x128xf32, #tpu.memory_space<vmem>>, vector<1x128xf32>
    %158 = vector.broadcast %157 : vector<1x128xf32> to vector<16x128xf32>
    %159 = arith.addf %156, %158 : vector<16x128xf32>
    %160 = arith.mulf %159, %159 : vector<16x128xf32>
    %161 = arith.mulf %159, %160 : vector<16x128xf32>
    %cst_66 = arith.constant 4.471500e-02 : f32
    %162 = vector.broadcast %cst_66 : f32 to vector<16x128xf32>
    %163 = arith.mulf %162, %161 : vector<16x128xf32>
    %164 = arith.addf %159, %163 : vector<16x128xf32>
    %cst_67 = arith.constant 0.797884583 : f32
    %165 = vector.broadcast %cst_67 : f32 to vector<16x128xf32>
    %166 = arith.mulf %165, %164 : vector<16x128xf32>
    %167 = math.tanh %166 : vector<16x128xf32>
    %cst_68 = arith.constant 1.000000e+00 : f32
    %168 = vector.broadcast %cst_68 : f32 to vector<16x128xf32>
    %169 = arith.addf %168, %167 : vector<16x128xf32>
    %cst_69 = arith.constant 5.000000e-01 : f32
    %170 = vector.broadcast %cst_69 : f32 to vector<16x128xf32>
    %171 = arith.mulf %170, %169 : vector<16x128xf32>
    %172 = arith.mulf %159, %171 : vector<16x128xf32>
    %173 = arith.truncf %172 : vector<16x128xf32> to vector<16x128xbf16>
    %c0_70 = arith.constant 0 : index
    %c0_71 = arith.constant 0 : index
    %174 = vector.load %arg14[%c0_70, %c0_71] : memref<128x32xbf16, #tpu.memory_space<vmem>>, vector<128x32xbf16>
    %cst_72 = arith.constant dense<0.000000e+00> : vector<16x32xf32>
    %175 = tpu.matmul %173, %174, %cst_72 {dimension_numbers = #tpu.dot_dimension_numbers<[1], [0], [0], [1], [0, 0, 1, 1], [], []>} : vector<16x128xbf16>, vector<128x32xbf16>, vector<16x32xf32> -> vector<16x32xf32>
    %c0_73 = arith.constant 0 : index
    %c0_74 = arith.constant 0 : index
    %176 = vector.load %arg15[%c0_73, %c0_74] : memref<1x32xf32, #tpu.memory_space<vmem>>, vector<1x32xf32>
    %177 = vector.broadcast %176 : vector<1x32xf32> to vector<16x32xf32>
    %178 = arith.addf %175, %177 : vector<16x32xf32>
    %179 = arith.addf %131, %178 : vector<16x32xf32>
    %c0_75 = arith.constant 0 : index
    %c0_76 = arith.constant 0 : index
    %180 = vector.load %arg16[%c0_75, %c0_76] : memref<1x32xf32, #tpu.memory_space<vmem>>, vector<1x32xf32>
    %181 = tpu.transpose %179, [1, 0] : vector<16x32xf32> -> vector<32x16xf32>
    %cst_77 = arith.constant dense<0.000000e+00> : vector<1x16xf32>
    %182 = tpu.matmul %180, %181, %cst_77 {dimension_numbers = #tpu.dot_dimension_numbers<[1], [0], [0], [1], [0, 0, 1, 1], [], []>} : vector<1x32xf32>, vector<32x16xf32>, vector<1x16xf32> -> vector<1x16xf32>
    %c0_78 = arith.constant 0 : index
    %c0_79 = arith.constant 0 : index
    %183 = vector.load %arg17[%c0_78, %c0_79] : memref<1x1xf32, #tpu.memory_space<vmem>>, vector<1x1xf32>
    %184 = vector.broadcast %183 : vector<1x1xf32> to vector<1x16xf32>
    %185 = arith.addf %182, %184 : vector<1x16xf32>
    %c0_80 = arith.constant 0 : index
    %c0_81 = arith.constant 0 : index
    %c0_82 = arith.constant 0 : index
    %186 = vector.load %arg18[%c0_80, %c0_81, %c0_82] : memref<1x1x16xf32, #tpu.memory_space<vmem>>, vector<1x1x16xf32>
    %187 = vector.shape_cast %186 : vector<1x1x16xf32> to vector<1x16xf32>
    %188 = vector.shape_cast %185 : vector<1x16xf32> to vector<1x1x16xf32>
    tpu.vector_store %arg18[%c0_80, %c0_81, %c0_82], %188 {strides = array<i32>} : memref<1x1x16xf32, #tpu.memory_space<vmem>>, vector<1x1x16xf32>,
    return
  }
  func.func @transform_0(%arg0: i32) -> (i32, i32, i32) {
    %c0_i32 = arith.constant 0 : i32
    %c0_i32_0 = arith.constant 0 : i32
    %c0_i32_1 = arith.constant 0 : i32
    return %arg0, %c0_i32, %c0_i32_0 : i32, i32, i32
  }
  func.func @transform_1(%arg0: i32) -> (i32, i32) {
    %c0_i32 = arith.constant 0 : i32
    %c0_i32_0 = arith.constant 0 : i32
    %c0_i32_1 = arith.constant 0 : i32
    return %c0_i32, %c0_i32_0 : i32, i32
  }
  func.func @transform_2(%arg0: i32) -> (i32, i32) {
    %c0_i32 = arith.constant 0 : i32
    %c0_i32_0 = arith.constant 0 : i32
    %c0_i32_1 = arith.constant 0 : i32
    return %c0_i32, %c0_i32_0 : i32, i32
  }
  func.func @transform_3(%arg0: i32) -> (i32, i32) {
    %c0_i32 = arith.constant 0 : i32
    %c0_i32_0 = arith.constant 0 : i32
    %c0_i32_1 = arith.constant 0 : i32
    return %c0_i32, %c0_i32_0 : i32, i32
  }
  func.func @transform_4(%arg0: i32) -> (i32, i32) {
    %c0_i32 = arith.constant 0 : i32
    %c0_i32_0 = arith.constant 0 : i32
    %c0_i32_1 = arith.constant 0 : i32
    return %c0_i32, %c0_i32_0 : i32, i32
  }
  func.func @transform_5(%arg0: i32) -> (i32, i32) {
    %c0_i32 = arith.constant 0 : i32
    %c0_i32_0 = arith.constant 0 : i32
    %c0_i32_1 = arith.constant 0 : i32
    return %c0_i32, %c0_i32_0 : i32, i32
  }
  func.func @transform_6(%arg0: i32) -> (i32, i32) {
    %c0_i32 = arith.constant 0 : i32
    %c0_i32_0 = arith.constant 0 : i32
    %c0_i32_1 = arith.constant 0 : i32
    return %c0_i32, %c0_i32_0 : i32, i32
  }
  func.func @transform_7(%arg0: i32) -> (i32, i32) {
    %c0_i32 = arith.constant 0 : i32
    %c0_i32_0 = arith.constant 0 : i32
    %c0_i32_1 = arith.constant 0 : i32
    return %c0_i32, %c0_i32_0 : i32, i32
  }
  func.func @transform_8(%arg0: i32) -> (i32, i32) {
    %c0_i32 = arith.constant 0 : i32
    %c0_i32_0 = arith.constant 0 : i32
    %c0_i32_1 = arith.constant 0 : i32
    return %c0_i32, %c0_i32_0 : i32, i32
  }
  func.func @transform_9(%arg0: i32) -> (i32, i32) {
    %c0_i32 = arith.constant 0 : i32
    %c0_i32_0 = arith.constant 0 : i32
    %c0_i32_1 = arith.constant 0 : i32
    return %c0_i32, %c0_i32_0 : i32, i32
  }
  func.func @transform_10(%arg0: i32) -> (i32, i32) {
    %c0_i32 = arith.constant 0 : i32
    %c0_i32_0 = arith.constant 0 : i32
    %c0_i32_1 = arith.constant 0 : i32
    return %c0_i32, %c0_i32_0 : i32, i32
  }
  func.func @transform_11(%arg0: i32) -> (i32, i32) {
    %c0_i32 = arith.constant 0 : i32
    %c0_i32_0 = arith.constant 0 : i32
    %c0_i32_1 = arith.constant 0 : i32
    return %c0_i32, %c0_i32_0 : i32, i32
  }
  func.func @transform_12(%arg0: i32) -> (i32, i32) {
    %c0_i32 = arith.constant 0 : i32
    %c0_i32_0 = arith.constant 0 : i32
    %c0_i32_1 = arith.constant 0 : i32
    return %c0_i32, %c0_i32_0 : i32, i32
  }
  func.func @transform_13(%arg0: i32) -> (i32, i32) {
    %c0_i32 = arith.constant 0 : i32
    %c0_i32_0 = arith.constant 0 : i32
    %c0_i32_1 = arith.constant 0 : i32
    return %c0_i32, %c0_i32_0 : i32, i32
  }
  func.func @transform_14(%arg0: i32) -> (i32, i32) {
    %c0_i32 = arith.constant 0 : i32
    %c0_i32_0 = arith.constant 0 : i32
    %c0_i32_1 = arith.constant 0 : i32
    return %c0_i32, %c0_i32_0 : i32, i32
  }
  func.func @transform_15(%arg0: i32) -> (i32, i32) {
    %c0_i32 = arith.constant 0 : i32
    %c0_i32_0 = arith.constant 0 : i32
    %c0_i32_1 = arith.constant 0 : i32
    return %c0_i32, %c0_i32_0 : i32, i32
  }
  func.func @transform_16(%arg0: i32) -> (i32, i32) {
    %c0_i32 = arith.constant 0 : i32
    %c0_i32_0 = arith.constant 0 : i32
    %c0_i32_1 = arith.constant 0 : i32
    return %c0_i32, %c0_i32_0 : i32, i32
  }
  func.func @transform_17(%arg0: i32) -> (i32, i32, i32) {
    %c0_i32 = arith.constant 0 : i32
    %c0_i32_0 = arith.constant 0 : i32
    %c0_i32_1 = arith.constant 0 : i32
    return %arg0, %c0_i32, %c0_i32_0 : i32, i32, i32
  }
}

</mosaic_0001>

<llo_original>
// kernel: mul.10
$region0: #{mul.10}
  %s0 = inlined_call_operand.vmem [shape: f32[3,64], index: 0, kind: input, shape index: {}]
  %s1 = inlined_call_operand.vmem [shape: f32[192], index: 1, kind: output, shape index: {}]
  $region1: #{mul.10} parent=0
    #allocation0 [shape = 'u8[4096]{0}', space=vmem, size = 0x1000, scoped, tag = 'scoped mem for output reshape']
    #allocation1 [shape = 'u8[4096]{0}', space=vmem, size = 0x1000, scoped, tag = 'scoped mem for input reshape']
    %s3 = sshllo.u32 0, 4
    %v4 = vld [vmem:[%s0] sm:%s3]
    %5 = vst [vmem:[#allocation1] sm:%s3] %v4
    %s6 = smov 3
    %v7 = vld [vmem:[#allocation1] ss:$2 sm:%s6]
    %vm8 = vcmask 523264
    %9 = vst.msk [vmem:[#allocation0] sm:$0x3] %vm8, %v7
    %s10 = scalar_lea.vmem [#allocation1], 1
    %v11 = vld [vmem:[%s10] sm:$0x1]
    %12 = vrot.lane.b32.xlu0 %v11, 64
    %v13 = vpop.permute.xlu0 %12
    %vm14 = vcmask 1048064
    %15 = vst.msk [vmem:[#allocation0] sm:$0x1] %vm14, %v13
    %s17 = sshllo.u32 0, 2
    %v19 = vld [vmem:[#allocation0] sm:%s17]
    %s20 = sshllo.u32 0, 2
    %21 = vst [vmem:[%s1] sm:%s20] %v19

// kernel: mul.13
$region0: #{mul.13}
  #allocation0 [shape = 's32[1]{0}', space=sflag, size = 0x4, scoped, tag = 'scoped memory for mul.13']
  %s0 = inlined_call_operand.vmem [shape: f32[192], index: 0, kind: input, shape index: {}]
  %s1 = inlined_call_operand.vmem [shape: f32[192], index: 1, kind: input, shape index: {}]
  %s2 = inlined_call_operand.vmem [shape: f32[192], index: 2, kind: output, shape index: {}]
  %v3 = vld [vmem:[%s0] sm:$0x3]
  %v4 = vld [vmem:[%s1] sm:$0x3]
  %5 = xla_tuple %v3, %v4
  %6 = xla_tuple %5
  %v7 = vmul.f32 %v3, %v4
  %8 = xla_tuple %v7
  %9 = vst [vmem:[%s2] sm:$0x3] %v7

// kernel: forward.1
$region0: #{forward.1}
  #allocation0 [shape = 'u32[]', space=smem, size = 0x4, offset = 0x4, fixed_abs, tag = 'smem constant byte address 0x4 - core index']
  #allocation1 [shape = 'u32[144,128]{1,0:T(1,128)}', space=vmem, size = 0x12000, scoped, tag = 'internal scratch']
  #allocation2 [shape = 'f32[1,1]{1,0:T(1,128)S(1)}', space=vmem, size = 0x200, scoped, tag = 'scoped memory for forward.1']
  %s0 = inlined_call_operand.vmem [shape: f32[2,16,192], index: 0, kind: input, shape index: {}]
  %s1 = inlined_call_operand.vmem [shape: bf16[192,32], index: 1, kind: input, shape index: {}]
  %s2 = inlined_call_operand.vmem [shape: f32[1,32], index: 2, kind: input, shape index: {}]
  %s3 = inlined_call_operand.vmem [shape: f32[1,32], index: 3, kind: input, shape index: {}]
  %s4 = inlined_call_operand.vmem [shape: f32[1,32], index: 4, kind: input, shape index: {}]
  %s5 = inlined_call_operand.vmem [shape: bf16[32,96], index: 5, kind: input, shape index: {}]
  %s6 = inlined_call_operand.vmem [shape: f32[1,96], index: 6, kind: input, shape index: {}]
  %s7 = inlined_call_operand.vmem [shape: bf16[32,32], index: 7, kind: input, shape index: {}]
  %s8 = inlined_call_operand.vmem [shape: f32[1,32], index: 8, kind: input, shape index: {}]
  %s9 = inlined_call_operand.vmem [shape: f32[1,32], index: 9, kind: input, shape index: {}]
  %s10 = inlined_call_operand.vmem [shape: f32[1,32], index: 10, kind: input, shape index: {}]
  %s11 = inlined_call_operand.vmem [shape: bf16[32,128], index: 11, kind: input, shape index: {}]
  %s12 = inlined_call_operand.vmem [shape: f32[1,128], index: 12, kind: input, shape index: {}]
  %s13 = inlined_call_operand.vmem [shape: bf16[128,32], index: 13, kind: input, shape index: {}]
  %s14 = inlined_call_operand.vmem [shape: f32[1,32], index: 14, kind: input, shape index: {}]
  %s15 = inlined_call_operand.vmem [shape: f32[1,32], index: 15, kind: input, shape index: {}]
  %s16 = inlined_call_operand.<no memory space> [shape: f32[1,1], index: 16, kind: input, shape index: {}]
  %s17 = inlined_call_operand.vmem [shape: f32[2,1,16], index: 17, kind: output, shape index: {}]
  %s18 = sld [smem:[#allocation0]]
  $region101: #{forward.1} parent=0
    _
  %s20 = ssub.s32 1, %s18
  %s21 = scalar_select 0, %s20, %s18
  %v22 = vstv %s16
  %23 = vst [vmem:[#allocation2] sm:$0x1] %v22
  loop: start=0, step=1, limit=4
  $region2: #{forward.1} parent=0 // loop_pre_header
    _
  $region3: #{forward.1} parent=0 // loop_header
    %s25 = sphi 0, %s29
    %p26 = scmp.ge.s32.totalorder %s25, 4
    %s35 = sphi 0, %s37
    %s38 = sphi 0, %s35
    %s39 = sphi 0, %s38
    %s55 = sphi 0, %s39
    %s59 = sphi 0, %s59
    %s61 = sphi 0, %s59
    %s62 = sphi 0, %s61
    %s76 = sphi 0, %s62
    %s80 = sphi 0, %s80
    %s82 = sphi 0, %s80
    %s83 = sphi 0, %s82
    %s97 = sphi 0, %s83
    %s101 = sphi 0, %s101
    %s103 = sphi 0, %s101
    %s104 = sphi 0, %s103
    %s118 = sphi 0, %s104
    %s122 = sphi 0, %s122
    %s124 = sphi 0, %s122
    %s125 = sphi 0, %s124
    %s139 = sphi 0, %s125
    %s143 = sphi 0, %s143
    %s145 = sphi 0, %s143
    %s146 = sphi 0, %s145
    %s160 = sphi 0, %s146
    %s164 = sphi 0, %s164
    %s166 = sphi 0, %s164
    %s167 = sphi 0, %s166
    %s181 = sphi 0, %s167
    %s185 = sphi 0, %s185
    %s187 = sphi 0, %s185
    %s188 = sphi 0, %s187
    %s202 = sphi 0, %s188
    %s206 = sphi 0, %s206
    %s208 = sphi 0, %s206
    %s209 = sphi 0, %s208
    %s223 = sphi 0, %s209
    %s227 = sphi 0, %s227
    %s229 = sphi 0, %s227
    %s230 = sphi 0, %s229
    %s244 = sphi 0, %s230
    %s248 = sphi 0, %s248
    %s250 = sphi 0, %s248
    %s251 = sphi 0, %s250
    %s265 = sphi 0, %s251
    %s269 = sphi 0, %s269
    %s271 = sphi 0, %s269
    %s272 = sphi 0, %s271
    %s286 = sphi 0, %s272
    %s290 = sphi 0, %s290
    %s292 = sphi 0, %s290
    %s293 = sphi 0, %s292
    %s307 = sphi 0, %s293
    %s311 = sphi 0, %s311
    %s313 = sphi 0, %s311
    %s314 = sphi 0, %s313
    %s328 = sphi 0, %s314
    %s332 = sphi 0, %s332
    %s334 = sphi 0, %s332
    %s335 = sphi 0, %s334
    %s349 = sphi 0, %s335
    %s353 = sphi 0, %s353
    %s355 = sphi 0, %s353
    %s356 = sphi 0, %s355
    %s370 = sphi 0, %s356
    %s374 = sphi 0, %s374
    %s376 = sphi 0, %s374
    %s377 = sphi 0, %s376
    %s391 = sphi 0, %s377
    %s397 = sphi 0, %s399
    %s400 = sphi 0, %s397
    %s401 = sphi 0, %s400
    %s417 = sphi 0, %s401
  $region4: #{forward.1} parent=0 // loop_header_branch
    %28 = sbr.rel (%p26) target = $region8
  $region5: #{forward.1} parent=0 // loop_body
    %s30 = ssub.s32 %s25, 1
    %s31 = ssub.s32 %s25, 2
    %s32 = sadd.s32 %s25, 1
    %s33 = ssub.s32 %s25, %s32
    %p34 = scmp.eq.s32.totalorder %s33, 0
    %s36 = sadd.s32 %s35, 1
    %s37 = scalar_select %p34, %s35, %s36
    %p40 = pneg %p34
    %p41 = scmp.eq.s32.totalorder %s25, 1
    %p42 = por %p40, %p41
    %p43 = scmp.ne.s32.totalorder %s35, %s38
    %p44 = scmp.eq.s32.totalorder %s25, 0
    %p45 = por %p43, %p44
    %p46 = scmp.ne.s32.totalorder %s35, %s38
    %p47 = scmp.eq.s32.totalorder %s30, 1
    %p48 = por %p46, %p47
    %p49 = scmp.ne.s32.totalorder %s38, %s39
    %p50 = scmp.eq.s32.totalorder %s30, 0
    %p51 = por %p49, %p50
    %p52 = scmp.ne.s32.totalorder %s38, %s39
    %p53 = scmp.eq.s32.totalorder %s31, 1
    %p54 = por %p52, %p53
    %p56 = scmp.ne.s32.totalorder %s39, %s55
    %p57 = scmp.eq.s32.totalorder %s31, 0
    %p58 = por %p56, %p57
    %s60 = sadd.s32 %s59, 1
    %p63 = scmp.eq.s32.totalorder %s25, 1
    %p64 = scmp.ne.s32.totalorder %s59, %s61
    %p65 = scmp.eq.s32.totalorder %s25, 0
    %p66 = por %p64, %p65
    %p67 = scmp.ne.s32.totalorder %s59, %s61
    %p68 = scmp.eq.s32.totalorder %s30, 1
    %p69 = por %p67, %p68
    %p70 = scmp.ne.s32.totalorder %s61, %s62
    %p71 = scmp.eq.s32.totalorder %s30, 0
    %p72 = por %p70, %p71
    %p73 = scmp.ne.s32.totalorder %s61, %s62
    %p74 = scmp.eq.s32.totalorder %s31, 1
    %p75 = por %p73, %p74
    %p77 = scmp.ne.s32.totalorder %s62, %s76
    %p78 = scmp.eq.s32.totalorder %s31, 0
    %p79 = por %p77, %p78
    %s81 = sadd.s32 %s80, 1
    %p84 = scmp.eq.s32.totalorder %s25, 1
    %p85 = scmp.ne.s32.totalorder %s80, %s82
    %p86 = scmp.eq.s32.totalorder %s25, 0
    %p87 = por %p85, %p86
    %p88 = scmp.ne.s32.totalorder %s80, %s82
    %p89 = scmp.eq.s32.totalorder %s30, 1
    %p90 = por %p88, %p89
    %p91 = scmp.ne.s32.totalorder %s82, %s83
    %p92 = scmp.eq.s32.totalorder %s30, 0
    %p93 = por %p91, %p92
    %p94 = scmp.ne.s32.totalorder %s82, %s83
    %p95 = scmp.eq.s32.totalorder %s31, 1
    %p96 = por %p94, %p95
    %p98 = scmp.ne.s32.totalorder %s83, %s97
    %p99 = scmp.eq.s32.totalorder %s31, 0
    %p100 = por %p98, %p99
    %s102 = sadd.s32 %s101, 1
    %p105 = scmp.eq.s32.totalorder %s25, 1
    %p106 = scmp.ne.s32.totalorder %s101, %s103
    %p107 = scmp.eq.s32.totalorder %s25, 0
    %p108 = por %p106, %p107
    %p109 = scmp.ne.s32.totalorder %s101, %s103
    %p110 = scmp.eq.s32.totalorder %s30, 1
    %p111 = por %p109, %p110
    %p112 = scmp.ne.s32.totalorder %s103, %s104
    %p113 = scmp.eq.s32.totalorder %s30, 0
    %p114 = por %p112, %p113
    %p115 = scmp.ne.s32.totalorder %s103, %s104
    %p116 = scmp.eq.s32.totalorder %s31, 1
    %p117 = por %p115, %p116
    %p119 = scmp.ne.s32.totalorder %s104, %s118
    %p120 = scmp.eq.s32.totalorder %s31, 0
    %p121 = por %p119, %p120
    %s123 = sadd.s32 %s122, 1
    %p126 = scmp.eq.s32.totalorder %s25, 1
    %p127 = scmp.ne.s32.totalorder %s122, %s124
    %p128 = scmp.eq.s32.totalorder %s25, 0
    %p129 = por %p127, %p128
    %p130 = scmp.ne.s32.totalorder %s122, %s124
    %p131 = scmp.eq.s32.totalorder %s30, 1
    %p132 = por %p130, %p131
    %p133 = scmp.ne.s32.totalorder %s124, %s125
    %p134 = scmp.eq.s32.totalorder %s30, 0
    %p135 = por %p133, %p134
    %p136 = scmp.ne.s32.totalorder %s124, %s125
    %p137 = scmp.eq.s32.totalorder %s31, 1
    %p138 = por %p136, %p137
    %p140 = scmp.ne.s32.totalorder %s125, %s139
    %p141 = scmp.eq.s32.totalorder %s31, 0
    %p142 = por %p140, %p141
    %s144 = sadd.s32 %s143, 1
    %p147 = scmp.eq.s32.totalorder %s25, 1
    %p148 = scmp.ne.s32.totalorder %s143, %s145
    %p149 = scmp.eq.s32.totalorder %s25, 0
    %p150 = por %p148, %p149
    %p151 = scmp.ne.s32.totalorder %s143, %s145
    %p152 = scmp.eq.s32.totalorder %s30, 1
    %p153 = por %p151, %p152
    %p154 = scmp.ne.s32.totalorder %s145, %s146
    %p155 = scmp.eq.s32.totalorder %s30, 0
    %p156 = por %p154, %p155
    %p157 = scmp.ne.s32.totalorder %s145, %s146
    %p158 = scmp.eq.s32.totalorder %s31, 1
    %p159 = por %p157, %p158
    %p161 = scmp.ne.s32.totalorder %s146, %s160
    %p162 = scmp.eq.s32.totalorder %s31, 0
    %p163 = por %p161, %p162
    %s165 = sadd.s32 %s164, 1
    %p168 = scmp.eq.s32.totalorder %s25, 1
    %p169 = scmp.ne.s32.totalorder %s164, %s166
    %p170 = scmp.eq.s32.totalorder %s25, 0
    %p171 = por %p169, %p170
    %p172 = scmp.ne.s32.totalorder %s164, %s166
    %p173 = scmp.eq.s32.totalorder %s30, 1
    %p174 = por %p172, %p173
    %p175 = scmp.ne.s32.totalorder %s166, %s167
    %p176 = scmp.eq.s32.totalorder %s30, 0
    %p177 = por %p175, %p176
    %p178 = scmp.ne.s32.totalorder %s166, %s167
    %p179 = scmp.eq.s32.totalorder %s31, 1
    %p180 = por %p178, %p179
    %p182 = scmp.ne.s32.totalorder %s167, %s181
    %p183 = scmp.eq.s32.totalorder %s31, 0
    %p184 = por %p182, %p183
    %s186 = sadd.s32 %s185, 1
    %p189 = scmp.eq.s32.totalorder %s25, 1
    %p190 = scmp.ne.s32.totalorder %s185, %s187
    %p191 = scmp.eq.s32.totalorder %s25, 0
    %p192 = por %p190, %p191
    %p193 = scmp.ne.s32.totalorder %s185, %s187
    %p194 = scmp.eq.s32.totalorder %s30, 1
    %p195 = por %p193, %p194
    %p196 = scmp.ne.s32.totalorder %s187, %s188
    %p197 = scmp.eq.s32.totalorder %s30, 0
    %p198 = por %p196, %p197
    %p199 = scmp.ne.s32.totalorder %s187, %s188
    %p200 = scmp.eq.s32.totalorder %s31, 1
    %p201 = por %p199, %p200
    %p203 = scmp.ne.s32.totalorder %s188, %s202
    %p204 = scmp.eq.s32.totalorder %s31, 0
    %p205 = por %p203, %p204
    %s207 = sadd.s32 %s206, 1
    %p210 = scmp.eq.s32.totalorder %s25, 1
    %p211 = scmp.ne.s32.totalorder %s206, %s208
    %p212 = scmp.eq.s32.totalorder %s25, 0
    %p213 = por %p211, %p212
    %p214 = scmp.ne.s32.totalorder %s206, %s208
    %p215 = scmp.eq.s32.totalorder %s30, 1
    %p216 = por %p214, %p215
    %p217 = scmp.ne.s32.totalorder %s208, %s209
    %p218 = scmp.eq.s32.totalorder %s30, 0
    %p219 = por %p217, %p218
    %p220 = scmp.ne.s32.totalorder %s208, %s209
    %p221 = scmp.eq.s32.totalorder %s31, 1
    %p222 = por %p220, %p221
    %p224 = scmp.ne.s32.totalorder %s209, %s223
    %p225 = scmp.eq.s32.totalorder %s31, 0
    %p226 = por %p224, %p225
    %s228 = sadd.s32 %s227, 1
    %p231 = scmp.eq.s32.totalorder %s25, 1
    %p232 = scmp.ne.s32.totalorder %s227, %s229
    %p233 = scmp.eq.s32.totalorder %s25, 0
    %p234 = por %p232, %p233
    %p235 = scmp.ne.s32.totalorder %s227, %s229
    %p236 = scmp.eq.s32.totalorder %s30, 1
    %p237 = por %p235, %p236
    %p238 = scmp.ne.s32.totalorder %s229, %s230
    %p239 = scmp.eq.s32.totalorder %s30, 0
    %p240 = por %p238, %p239
    %p241 = scmp.ne.s32.totalorder %s229, %s230
    %p242 = scmp.eq.s32.totalorder %s31, 1
    %p243 = por %p241, %p242
    %p245 = scmp.ne.s32.totalorder %s230, %s244
    %p246 = scmp.eq.s32.totalorder %s31, 0
    %p247 = por %p245, %p246
    %s249 = sadd.s32 %s248, 1
    %p252 = scmp.eq.s32.totalorder %s25, 1
    %p253 = scmp.ne.s32.totalorder %s248, %s250
    %p254 = scmp.eq.s32.totalorder %s25, 0
    %p255 = por %p253, %p254
    %p256 = scmp.ne.s32.totalorder %s248, %s250
    %p257 = scmp.eq.s32.totalorder %s30, 1
    %p258 = por %p256, %p257
    %p259 = scmp.ne.s32.totalorder %s250, %s251
    %p260 = scmp.eq.s32.totalorder %s30, 0
    %p261 = por %p259, %p260
    %p262 = scmp.ne.s32.totalorder %s250, %s251
    %p263 = scmp.eq.s32.totalorder %s31, 1
    %p264 = por %p262, %p263
    %p266 = scmp.ne.s32.totalorder %s251, %s265
    %p267 = scmp.eq.s32.totalorder %s31, 0
    %p268 = por %p266, %p267
    %s270 = sadd.s32 %s269, 1
    %p273 = scmp.eq.s32.totalorder %s25, 1
    %p274 = scmp.ne.s32.totalorder %s269, %s271
    %p275 = scmp.eq.s32.totalorder %s25, 0
    %p276 = por %p274, %p275
    %p277 = scmp.ne.s32.totalorder %s269, %s271
    %p278 = scmp.eq.s32.totalorder %s30, 1
    %p279 = por %p277, %p278
    %p280 = scmp.ne.s32.totalorder %s271, %s272
    %p281 = scmp.eq.s32.totalorder %s30, 0
    %p282 = por %p280, %p281
    %p283 = scmp.ne.s32.totalorder %s271, %s272
    %p284 = scmp.eq.s32.totalorder %s31, 1
    %p285 = por %p283, %p284
    %p287 = scmp.ne.s32.totalorder %s272, %s286
    %p288 = scmp.eq.s32.totalorder %s31, 0
    %p289 = por %p287, %p288
    %s291 = sadd.s32 %s290, 1
    %p294 = scmp.eq.s32.totalorder %s25, 1
    %p295 = scmp.ne.s32.totalorder %s290, %s292
    %p296 = scmp.eq.s32.totalorder %s25, 0
    %p297 = por %p295, %p296
    %p298 = scmp.ne.s32.totalorder %s290, %s292
    %p299 = scmp.eq.s32.totalorder %s30, 1
    %p300 = por %p298, %p299
    %p301 = scmp.ne.s32.totalorder %s292, %s293
    %p302 = scmp.eq.s32.totalorder %s30, 0
    %p303 = por %p301, %p302
    %p304 = scmp.ne.s32.totalorder %s292, %s293
    %p305 = scmp.eq.s32.totalorder %s31, 1
    %p306 = por %p304, %p305
    %p308 = scmp.ne.s32.totalorder %s293, %s307
    %p309 = scmp.eq.s32.totalorder %s31, 0
    %p310 = por %p308, %p309
    %s312 = sadd.s32 %s311, 1
    %p315 = scmp.eq.s32.totalorder %s25, 1
    %p316 = scmp.ne.s32.totalorder %s311, %s313
    %p317 = scmp.eq.s32.totalorder %s25, 0
    %p318 = por %p316, %p317
    %p319 = scmp.ne.s32.totalorder %s311, %s313
    %p320 = scmp.eq.s32.totalorder %s30, 1
    %p321 = por %p319, %p320
    %p322 = scmp.ne.s32.totalorder %s313, %s314
    %p323 = scmp.eq.s32.totalorder %s30, 0
    %p324 = por %p322, %p323
    %p325 = scmp.ne.s32.totalorder %s313, %s314
    %p326 = scmp.eq.s32.totalorder %s31, 1
    %p327 = por %p325, %p326
    %p329 = scmp.ne.s32.totalorder %s314, %s328
    %p330 = scmp.eq.s32.totalorder %s31, 0
    %p331 = por %p329, %p330
    %s333 = sadd.s32 %s332, 1
    %p336 = scmp.eq.s32.totalorder %s25, 1
    %p337 = scmp.ne.s32.totalorder %s332, %s334
    %p338 = scmp.eq.s32.totalorder %s25, 0
    %p339 = por %p337, %p338
    %p340 = scmp.ne.s32.totalorder %s332, %s334
    %p341 = scmp.eq.s32.totalorder %s30, 1
    %p342 = por %p340, %p341
    %p343 = scmp.ne.s32.totalorder %s334, %s335
    %p344 = scmp.eq.s32.totalorder %s30, 0
    %p345 = por %p343, %p344
    %p346 = scmp.ne.s32.totalorder %s334, %s335
    %p347 = scmp.eq.s32.totalorder %s31, 1
    %p348 = por %p346, %p347
    %p350 = scmp.ne.s32.totalorder %s335, %s349
    %p351 = scmp.eq.s32.totalorder %s31, 0
    %p352 = por %p350, %p351
    %s354 = sadd.s32 %s353, 1
    %p357 = scmp.eq.s32.totalorder %s25, 1
    %p358 = scmp.ne.s32.totalorder %s353, %s355
    %p359 = scmp.eq.s32.totalorder %s25, 0
    %p360 = por %p358, %p359
    %p361 = scmp.ne.s32.totalorder %s353, %s355
    %p362 = scmp.eq.s32.totalorder %s30, 1
    %p363 = por %p361, %p362
    %p364 = scmp.ne.s32.totalorder %s355, %s356
    %p365 = scmp.eq.s32.totalorder %s30, 0
    %p366 = por %p364, %p365
    %p367 = scmp.ne.s32.totalorder %s355, %s356
    %p368 = scmp.eq.s32.totalorder %s31, 1
    %p369 = por %p367, %p368
    %p371 = scmp.ne.s32.totalorder %s356, %s370
    %p372 = scmp.eq.s32.totalorder %s31, 0
    %p373 = por %p371, %p372
    %s375 = sadd.s32 %s374, 1
    %p378 = scmp.eq.s32.totalorder %s25, 1
    %p379 = scmp.ne.s32.totalorder %s374, %s376
    %p380 = scmp.eq.s32.totalorder %s25, 0
    %p381 = por %p379, %p380
    %p382 = scmp.ne.s32.totalorder %s374, %s376
    %p383 = scmp.eq.s32.totalorder %s30, 1
    %p384 = por %p382, %p383
    %p385 = scmp.ne.s32.totalorder %s376, %s377
    %p386 = scmp.eq.s32.totalorder %s30, 0
    %p387 = por %p385, %p386
    %p388 = scmp.ne.s32.totalorder %s376, %s377
    %p389 = scmp.eq.s32.totalorder %s31, 1
    %p390 = por %p388, %p389
    %p392 = scmp.ne.s32.totalorder %s377, %s391
    %p393 = scmp.eq.s32.totalorder %s31, 0
    %p394 = por %p392, %p393
    %s395 = ssub.s32 %s25, %s32
    %p396 = scmp.eq.s32.totalorder %s395, 0
    %s398 = sadd.s32 %s397, 1
    %s399 = scalar_select %p396, %s397, %s398
    %p402 = pneg %p396
    %p403 = scmp.eq.s32.totalorder %s25, 1
    %p404 = por %p402, %p403
    %p405 = scmp.ne.s32.totalorder %s397, %s400
    %p406 = scmp.eq.s32.totalorder %s25, 0
    %p407 = por %p405, %p406
    %p408 = scmp.ne.s32.totalorder %s397, %s400
    %p409 = scmp.eq.s32.totalorder %s30, 1
    %p410 = por %p408, %p409
    %p411 = scmp.ne.s32.totalorder %s400, %s401
    %p412 = scmp.eq.s32.totalorder %s30, 0
    %p413 = por %p411, %p412
    %p414 = scmp.ne.s32.totalorder %s400, %s401
    %p415 = scmp.eq.s32.totalorder %s31, 1
    %p416 = por %p414, %p415
    %p418 = scmp.ne.s32.totalorder %s401, %s417
    %p419 = scmp.eq.s32.totalorder %s31, 0
    %p420 = por %p418, %p419
    %p421 = scmp.le.s32.totalorder 1, %s25
    %p422 = scmp.lt.s32.totalorder %s25, 3
    %p423 = pnand %p421, %p422
    %p424 = pneg %p423
    // Predicated region
    $region9: #{forward.1} parent=5 // pred_check
      _
    $region10: #{forward.1} parent=5 // pred_check_branch
      %426 = sbr.rel (%p423) target = $region12
    $region11: #{forward.1} parent=5 // pred_region
      %s427 = ssub.s32 %s25, 1
      // Predicated region
      $region13: #{forward.1} parent=11 // pred_check
        %p428 = pneg %p72
      $region14: #{forward.1} parent=11 // pred_check_branch
        %430 = sbr.rel (%p428) target = $region16
      $region15: #{forward.1} parent=11 // pred_region
        _
      $region16: #{forward.1} parent=11 // pred_fallthru
        _
      // Predicated region
      $region17: #{forward.1} parent=11 // pred_check
        %p431 = pneg %p93
      $region18: #{forward.1} parent=11 // pred_check_branch
        %433 = sbr.rel (%p431) target = $region20
      $region19: #{forward.1} parent=11 // pred_region
        _
      $region20: #{forward.1} parent=11 // pred_fallthru
        _
      // Predicated region
      $region21: #{forward.1} parent=11 // pred_check
        %p434 = pneg %p114
      $region22: #{forward.1} parent=11 // pred_check_branch
        %436 = sbr.rel (%p434) target = $region24
      $region23: #{forward.1} parent=11 // pred_region
        _
      $region24: #{forward.1} parent=11 // pred_fallthru
        _
      // Predicated region
      $region25: #{forward.1} parent=11 // pred_check
        %p437 = pneg %p135
      $region26: #{forward.1} parent=11 // pred_check_branch
        %439 = sbr.rel (%p437) target = $region28
      $region27: #{forward.1} parent=11 // pred_region
        _
      $region28: #{forward.1} parent=11 // pred_fallthru
        _
      // Predicated region
      $region29: #{forward.1} parent=11 // pred_check
        %p440 = pneg %p156
      $region30: #{forward.1} parent=11 // pred_check_branch
        %442 = sbr.rel (%p440) target = $region32
      $region31: #{forward.1} parent=11 // pred_region
        _
      $region32: #{forward.1} parent=11 // pred_fallthru
        _
      // Predicated region
      $region33: #{forward.1} parent=11 // pred_check
        %p443 = pneg %p177
      $region34: #{forward.1} parent=11 // pred_check_branch
        %445 = sbr.rel (%p443) target = $region36
      $region35: #{forward.1} parent=11 // pred_region
        _
      $region36: #{forward.1} parent=11 // pred_fallthru
        _
      // Predicated region
      $region37: #{forward.1} parent=11 // pred_check
        %p446 = pneg %p198
      $region38: #{forward.1} parent=11 // pred_check_branch
        %448 = sbr.rel (%p446) target = $region40
      $region39: #{forward.1} parent=11 // pred_region
        _
      $region40: #{forward.1} parent=11 // pred_fallthru
        _
      // Predicated region
      $region41: #{forward.1} parent=11 // pred_check
        %p449 = pneg %p219
      $region42: #{forward.1} parent=11 // pred_check_branch
        %451 = sbr.rel (%p449) target = $region44
      $region43: #{forward.1} parent=11 // pred_region
        _
      $region44: #{forward.1} parent=11 // pred_fallthru
        _
      // Predicated region
      $region45: #{forward.1} parent=11 // pred_check
        %p452 = pneg %p240
      $region46: #{forward.1} parent=11 // pred_check_branch
        %454 = sbr.rel (%p452) target = $region48
      $region47: #{forward.1} parent=11 // pred_region
        _
      $region48: #{forward.1} parent=11 // pred_fallthru
        _
      // Predicated region
      $region49: #{forward.1} parent=11 // pred_check
        %p455 = pneg %p261
      $region50: #{forward.1} parent=11 // pred_check_branch
        %457 = sbr.rel (%p455) target = $region52
      $region51: #{forward.1} parent=11 // pred_region
        _
      $region52: #{forward.1} parent=11 // pred_fallthru
        _
      // Predicated region
      $region53: #{forward.1} parent=11 // pred_check
        %p458 = pneg %p282
      $region54: #{forward.1} parent=11 // pred_check_branch
        %460 = sbr.rel (%p458) target = $region56
      $region55: #{forward.1} parent=11 // pred_region
        _
      $region56: #{forward.1} parent=11 // pred_fallthru
        _
      // Predicated region
      $region57: #{forward.1} parent=11 // pred_check
        %p461 = pneg %p303
      $region58: #{forward.1} parent=11 // pred_check_branch
        %463 = sbr.rel (%p461) target = $region60
      $region59: #{forward.1} parent=11 // pred_region
        _
      $region60: #{forward.1} parent=11 // pred_fallthru
        _
      // Predicated region
      $region61: #{forward.1} parent=11 // pred_check
        %p464 = pneg %p324
      $region62: #{forward.1} parent=11 // pred_check_branch
        %466 = sbr.rel (%p464) target = $region64
      $region63: #{forward.1} parent=11 // pred_region
        _
      $region64: #{forward.1} parent=11 // pred_fallthru
        _
      // Predicated region
      $region65: #{forward.1} parent=11 // pred_check
        %p467 = pneg %p345
      $region66: #{forward.1} parent=11 // pred_check_branch
        %469 = sbr.rel (%p467) target = $region68
      $region67: #{forward.1} parent=11 // pred_region
        _
      $region68: #{forward.1} parent=11 // pred_fallthru
        _
      // Predicated region
      $region69: #{forward.1} parent=11 // pred_check
        %p470 = pneg %p366
      $region70: #{forward.1} parent=11 // pred_check_branch
        %472 = sbr.rel (%p470) target = $region72
      $region71: #{forward.1} parent=11 // pred_region
        _
      $region72: #{forward.1} parent=11 // pred_fallthru
        _
      // Predicated region
      $region73: #{forward.1} parent=11 // pred_check
        %p473 = pneg %p387
      $region74: #{forward.1} parent=11 // pred_check_branch
        %475 = sbr.rel (%p473) target = $region76
      $region75: #{forward.1} parent=11 // pred_region
        _
      $region76: #{forward.1} parent=11 // pred_fallthru
        _
    $region12: #{forward.1} parent=5 // pred_fallthru
      _
    %p476 = scmp.lt.s32.totalorder %s25, 2
    // Predicated region
    $region77: #{forward.1} parent=5 // pred_check
      %p477 = pneg %p476
    $region78: #{forward.1} parent=5 // pred_check_branch
      %479 = sbr.rel (%p477) target = $region80
    $region79: #{forward.1} parent=5 // pred_region
      // Predicated region
      $region81: #{forward.1} parent=79 // pred_check
        %p480 = pneg %p45
      $region82: #{forward.1} parent=79 // pred_check_branch
        %482 = sbr.rel (%p480) target = $region84
      $region83: #{forward.1} parent=79 // pred_region
        %p483 = scmp.lt.s32.totalorder %s25, 1
        %s484 = scalar_select %p483, %s25, 1
        %s485 = smul.addr %s484, 4
        %s486 = smul.addr %s485, 8
        %s487 = scalar_lea.vmem %s0, %s486
      $region84: #{forward.1} parent=79 // pred_fallthru
        _
    $region80: #{forward.1} parent=5 // pred_fallthru
      _
    %p488 = scmp.le.s32.totalorder 1, %s25
    %p489 = scmp.lt.s32.totalorder %s25, 3
    %p490 = pnand %p488, %p489
    %p491 = pneg %p490
    // Predicated region
    $region85: #{forward.1} parent=5 // pred_check
      _
    $region86: #{forward.1} parent=5 // pred_check_branch
      %493 = sbr.rel (%p490) target = $region88
    $region87: #{forward.1} parent=5 // pred_region
      %s494 = ssub.s32 %s25, 1
      %p495 = scmp.lt.s32.totalorder %s30, 1
      %s496 = scalar_select %p495, %s30, 1
      %s497 = smul.addr %s496, 4
      %s498 = smul.addr %s497, 8
      %s499 = scalar_lea.vmem %s0, %s498
      %p500 = pneg %p51
      %p501 = pneg %p48
      %p502 = pneg %p72
      %p503 = pneg %p69
      %p504 = pneg %p93
      %p505 = pneg %p90
      %p506 = pneg %p114
      %p507 = pneg %p111
      %p508 = pneg %p135
      %p509 = pneg %p132
      %p510 = pneg %p156
      %p511 = pneg %p153
      %p512 = pneg %p177
      %p513 = pneg %p174
      %p514 = pneg %p198
      %p515 = pneg %p195
      %p516 = pneg %p219
      %p517 = pneg %p216
      %p518 = pneg %p240
      %p519 = pneg %p237
      %p520 = pneg %p261
      %p521 = pneg %p258
      %p522 = pneg %p282
      %p523 = pneg %p279
      %p524 = pneg %p303
      %p525 = pneg %p300
      %p526 = pneg %p324
      %p527 = pneg %p321
      %p528 = pneg %p345
      %p529 = pneg %p342
      %p530 = pneg %p366
      %p531 = pneg %p363
      %p532 = pneg %p387
      %p533 = pneg %p384
      %p534 = pneg %p413
      %p535 = pneg %p410
      %p536 = scmp.lt.s32.totalorder %s30, 1
      %s537 = scalar_select %p536, %s30, 1
      %s538 = scalar_lea.vmem %s17, %s537
      %p539 = scmp.lt.s32.totalorder %s30, 1
      %s540 = scalar_select %p539, %s30, 1
      %s541 = smul.addr %s540, 4
      %s542 = smul.addr %s541, 8
      %s543 = scalar_lea.vmem %s0, %s542
      %p544 = scmp.lt.s32.totalorder %s30, 1
      %s545 = scalar_select %p544, %s30, 1
      %s546 = scalar_lea.vmem %s17, %s545
      %v548 = vld [vmem:[%s543] sm:$0xff]
      %v549 = vld [vmem:[%s543 + $0x8] sm:$0xff]
      %v550 = vld [vmem:[%s543 + $0x10] sm:$0xff]
      %v551 = vld [vmem:[%s543 + $0x18] sm:$0xff]
      %v552 = vpack.c.bf16 %v550, %v548
      %v553 = vpack.c.bf16 %v551, %v549
      %v554 = vld [vmem:[%s1] sm:$0xf]
      %v555 = vld [vmem:[%s1 + $0x4] sm:$0xf]
      %v556 = vld [vmem:[%s1 + $0x8] sm:$0xf]
      %v557 = vld [vmem:[%s1 + $0xc] sm:$0xf]
      %v558 = vld [vmem:[%s1 + $0x10] sm:$0xf]
      %v559 = vld [vmem:[%s1 + $0x14] sm:$0xf]
      %v560 = vld [vmem:[%s1 + $0x18] sm:$0xf]
      %v561 = vld [vmem:[%s1 + $0x1c] sm:$0xf]
      %v562 = vld [vmem:[%s1 + $0x20] sm:$0xf]
      %v563 = vld [vmem:[%s1 + $0x24] sm:$0xf]
      %v564 = vld [vmem:[%s1 + $0x28] sm:$0xf]
      %v565 = vld [vmem:[%s1 + $0x2c] sm:$0xf]
      %v566 = vld [vmem:[%s1 + $0x30] sm:$0xf]
      %v567 = vld [vmem:[%s1 + $0x34] sm:$0xf]
      %v568 = vld [vmem:[%s1 + $0x38] sm:$0xf]
      %v569 = vld [vmem:[%s1 + $0x3c] sm:$0xf]
      %v570 = vld [vmem:[%s1 + $0x40] sm:$0xf]
      %v571 = vld [vmem:[%s1 + $0x44] sm:$0xf]
      %v572 = vld [vmem:[%s1 + $0x48] sm:$0xf]
      %v573 = vld [vmem:[%s1 + $0x4c] sm:$0xf]
      %v574 = vld [vmem:[%s1 + $0x50] sm:$0xf]
      %v575 = vld [vmem:[%s1 + $0x54] sm:$0xf]
      %v576 = vld [vmem:[%s1 + $0x58] sm:$0xf]
      %v577 = vld [vmem:[%s1 + $0x5c] sm:$0xf]
      %v578 = vld [vmem:[%s2] sm:$0x1]
      %v580 = vlaneseq
      %v581 = vshrl.u32 %v580, 7
      %v582 = vsub.s32 0, %v581
      %v583 = vrot.slane %v578, %v582
      %v609 = vunpack.c.l.b16 %v554
      %v610 = vunpack.c.l.b16 %v555
      %v611 = vunpack.c.l.b16 %v556
      %v612 = vunpack.c.l.b16 %v557
      %v613 = vunpack.c.l.b16 %v558
      %v614 = vunpack.c.l.b16 %v559
      %v615 = vunpack.c.l.b16 %v560
      %v616 = vunpack.c.l.b16 %v561
      %v617 = vunpack.c.l.b16 %v562
      %v618 = vunpack.c.l.b16 %v563
      %v619 = vunpack.c.l.b16 %v564
      %v620 = vunpack.c.l.b16 %v565
      %v621 = vunpack.c.l.b16 %v566
      %v622 = vunpack.c.l.b16 %v567
      %v623 = vunpack.c.l.b16 %v568
      %v624 = vunpack.c.l.b16 %v569
      %v625 = vunpack.c.l.b16 %v570
      %v626 = vunpack.c.l.b16 %v571
      %v627 = vunpack.c.l.b16 %v572
      %v628 = vunpack.c.l.b16 %v573
      %v629 = vunpack.c.l.b16 %v574
      %v630 = vunpack.c.l.b16 %v575
      %v631 = vunpack.c.l.b16 %v576
      %v632 = vunpack.c.l.b16 %v577
      %v633 = vpack.c.b16 %v610, %v609
      %v634 = vpack.c.b16 %v612, %v611
      %v635 = vpack.c.b16 %v614, %v613
      %v636 = vpack.c.b16 %v616, %v615
      %v637 = vpack.c.b16 %v618, %v617
      %v638 = vpack.c.b16 %v620, %v619
      %v639 = vpack.c.b16 %v622, %v621
      %v640 = vpack.c.b16 %v624, %v623
      %v641 = vpack.c.b16 %v626, %v625
      %v642 = vpack.c.b16 %v628, %v627
      %v643 = vpack.c.b16 %v630, %v629
      %v644 = vpack.c.b16 %v632, %v631
      %vm657 = vcmask 523264
      %v659 = vsel %vm657, %v553, 0
      %661 = vmatprep.subr.bf16.mxu0 0
      %662 = vmatpush1.bf16.msra.mxu0 %v633
      %663 = vmatprep.subr.bf16.mxu0 0
      %664 = vmatpush1.bf16.msra.mxu0 %v634
      %665 = vmatprep.subr.bf16.mxu0 0
      %666 = vmatpush1.bf16.msra.mxu0 %v635
      %667 = vmatprep.subr.bf16.mxu0 0
      %668 = vmatpush1.bf16.msra.mxu0 %v636
      %669 = vmatprep.subr.bf16.mxu0 0
      %670 = vmatpush1.bf16.msra.mxu0 %v637
      %671 = vmatprep.subr.bf16.mxu0 0
      %672 = vmatpush1.bf16.msra.mxu0 %v638
      %673 = vmatprep.subr.bf16.mxu0 0
      %674 = vmatpush1.bf16.msra.mxu0 %v639
      %675 = vmatprep.subr.bf16.mxu0 0
      %676 = vmatpush1.bf16.msra.mxu0 %v640
      %677 = vmatprep.subr.bf16.mxu0 0
      %678 = vmatpush1.bf16.msra.mxu0 %v641
      %679 = vmatprep.subr.bf16.mxu0 0
      %680 = vmatpush1.bf16.msra.mxu0 %v642
      %681 = vmatprep.subr.bf16.mxu0 0
      %682 = vmatpush1.bf16.msra.mxu0 %v643
      %683 = vmatprep.subr.bf16.mxu0 0
      %684 = vmatpush1.bf16.msra.mxu0 %v644
      %685 = vmatprep.subr.bf16.mxu0 0
      %686 = vmatpush1.bf16.msra.mxu0 0
      %687 = vmatprep.subr.bf16.mxu0 0
      %688 = vmatpush1.bf16.msra.mxu0 0
      %689 = vmatprep.subr.bf16.mxu0 0
      %690 = vmatpush1.bf16.msra.mxu0 0
      %691 = vmatprep.subr.bf16.mxu0 0
      %692 = vmatpush1.bf16.msra.mxu0 0
      %693 = vmatprep.mubr.bf16.mxu0 %v659
      %694 = vmatmul.mubr.bf16.gmra.mrb[0].mxu0 %v552
      %v695 = vpop.f32.mrb[0].mxu0
      %v696 = vadd.f32 %v583, %v695
      %v697 = vpop.f32.mrb[0].mxu0
      %v698 = vpop.f32.mrb[0].mxu0
      %v699 = vadd.f32 %v583, %v698
      %v700 = vpop.f32.mrb[0].mxu0
      %701 = vdwg.mxu0
      %v702 = vld [vmem:[%s3] sm:$0x1]
      %v703 = vld [vmem:[%s4] sm:$0x1]
      %vm704 = vcmask 261120
      %v705 = vsel %vm704, %v696, 0.0
      %706 = vadd.xlane.f32.xlu0 %v705
      %v707 = vpop.xlane.xlu0 %706
      %v708 = vsel %vm704, %v699, 0.0
      %709 = vadd.xlane.f32.xlu0 %v708
      %v710 = vpop.xlane.xlu0 %709
      %v711 = vrcp.pop 32.0
      %v712 = vmul.f32 %v707, %v711
      %v713 = vmul.f32 %v710, %v711
      %v714 = vsub.f32 %v696, %v712
      %v715 = vsub.f32 %v699, %v713
      %v716 = vmul.f32 %v714, %v714
      %v717 = vmul.f32 %v715, %v715
      %v718 = vsel %vm704, %v716, 0.0
      %719 = vadd.xlane.f32.xlu0 %v718
      %v720 = vpop.xlane.xlu0 %719
      %v721 = vsel %vm704, %v717, 0.0
      %722 = vadd.xlane.f32.xlu0 %v721
      %v723 = vpop.xlane.xlu0 %722
      %v724 = vmul.f32 %v720, %v711
      %v725 = vmul.f32 %v723, %v711
      %v726 = vadd.f32 %v724, 1e-05
      %v727 = vadd.f32 %v725, 1e-05
      %v728 = vrsqrt.pop %v726
      %v729 = vrsqrt.pop %v727
      %v730 = vmul.f32 %v714, %v728
      %v731 = vmul.f32 %v715, %v729
      %v733 = vlaneseq
      %v734 = vshrl.u32 %v733, 7
      %v735 = vsub.s32 0, %v734
      %v736 = vrot.slane %v702, %v735
      %v738 = vmul.f32 %v730, %v736
      %v739 = vmul.f32 %v731, %v736
      %v741 = vlaneseq
      %v742 = vshrl.u32 %v741, 7
      %v743 = vsub.s32 0, %v742
      %v744 = vrot.slane %v703, %v743
      %v746 = vadd.f32 %v738, %v744
      %v747 = vadd.f32 %v739, %v744
      %v748 = vpack.c.bf16 %v747, %v746
      %v749 = vld [vmem:[%s5] sm:$0xf]
      %v750 = vld [vmem:[%s5 + $0x4] sm:$0xf]
      %v751 = vld [vmem:[%s5 + $0x8] sm:$0xf]
      %v752 = vld [vmem:[%s5 + $0xc] sm:$0xf]
      %v753 = vld [vmem:[%s6] sm:$0x1]
      %v755 = vlaneseq
      %v756 = vshrl.u32 %v755, 7
      %v757 = vsub.s32 0, %v756
      %v758 = vrot.slane %v753, %v757
      %v764 = vunpack.c.l.b16 %v749
      %v765 = vunpack.c.l.b16 %v750
      %v766 = vunpack.c.l.b16 %v751
      %v767 = vunpack.c.l.b16 %v752
      %v768 = vpack.c.b16 %v765, %v764
      %v769 = vpack.c.b16 %v767, %v766
      %v773 = vsel %vm704, %v748, 0
      %775 = vmatprep.subr.bf16.mxu0 0
      %776 = vmatpush1.bf16.msra.mxu0 %v768
      %777 = vmatprep.subr.bf16.mxu0 0
      %778 = vmatpush1.bf16.msra.mxu0 %v769
      %779 = vmatprep.subr.bf16.mxu0 0
      %780 = vmatpush1.bf16.msra.mxu0 0
      %781 = vmatprep.subr.bf16.mxu0 0
      %782 = vmatpush1.bf16.msra.mxu0 0
      %783 = vmatprep.subr.bf16.mxu0 0
      %784 = vmatpush1.bf16.msra.mxu0 0
      %785 = vmatprep.subr.bf16.mxu0 0
      %786 = vmatpush1.bf16.msra.mxu0 0
      %787 = vmatprep.subr.bf16.mxu0 0
      %788 = vmatpush1.bf16.msra.mxu0 0
      %789 = vmatprep.subr.bf16.mxu0 0
      %790 = vmatpush1.bf16.msra.mxu0 0
      %791 = vmatprep.subr.bf16.mxu0 0
      %792 = vmatpush1.bf16.msra.mxu0 0
      %793 = vmatprep.subr.bf16.mxu0 0
      %794 = vmatpush1.bf16.msra.mxu0 0
      %795 = vmatprep.subr.bf16.mxu0 0
      %796 = vmatpush1.bf16.msra.mxu0 0
      %797 = vmatprep.subr.bf16.mxu0 0
      %798 = vmatpush1.bf16.msra.mxu0 0
      %799 = vmatprep.subr.bf16.mxu0 0
      %800 = vmatpush1.bf16.msra.mxu0 0
      %801 = vmatprep.subr.bf16.mxu0 0
      %802 = vmatpush1.bf16.msra.mxu0 0
      %803 = vmatprep.subr.bf16.mxu0 0
      %804 = vmatpush1.bf16.msra.mxu0 0
      %805 = vmatprep.subr.bf16.mxu0 0
      %806 = vmatpush1.bf16.msra.mxu0 0
      %807 = vmatprep.mubr.bf16.mxu0 0
      %808 = vmatmul.mubr.bf16.gmra.mrb[0].mxu0 %v773
      %v809 = vpop.f32.mrb[0].mxu0
      %v810 = vadd.f32 %v758, %v809
      %v811 = vpop.f32.mrb[0].mxu0
      %v812 = vpop.f32.mrb[0].mxu0
      %v813 = vadd.f32 %v758, %v812
      %v814 = vpop.f32.mrb[0].mxu0
      %815 = vdwg.mxu0
      %818 = vrot.lane.b32.xlu0 %v810, 96
      %v819 = vpop.permute.xlu0 %818
      %820 = vrot.lane.b32.xlu0 %v813, 96
      %v821 = vpop.permute.xlu0 %820
      %vm822 = vcmask 64512
      %v823 = vsel %vm822, %v810, 0
      %v825 = vsel %vm822, %v813, 0
      %v827 = vsel %vm822, %v819, 0
      %v829 = vsel %vm822, %v821, 0
      %831 = vmatprep.subr.mxu0 0.0
      %832 = vmatpush1.xpose.msra.mxu0 %v827
      %833 = vmatprep.subr.mxu0 0.0
      %834 = vmatpush1.xpose.msra.mxu0 %v829
      %835 = vmatprep.subr.mxu0 0.0
      %836 = vmatpush1.xpose.msra.mxu0 0.0
      %837 = vmatprep.subr.mxu0 0.0
      %838 = vmatpush1.xpose.msra.mxu0 0.0
      %839 = vmatprep.subr.mxu0 0.0
      %840 = vmatpush1.xpose.msra.mxu0 0.0
      %841 = vmatprep.subr.mxu0 0.0
      %842 = vmatpush1.xpose.msra.mxu0 0.0
      %843 = vmatprep.subr.mxu0 0.0
      %844 = vmatpush1.xpose.msra.mxu0 0.0
      %845 = vmatprep.subr.mxu0 0.0
      %846 = vmatpush1.xpose.msra.mxu0 0.0
      %847 = vmatprep.subr.mxu0 0.0
      %848 = vmatpush1.xpose.msra.mxu0 0.0
      %849 = vmatprep.subr.mxu0 0.0
      %850 = vmatpush1.xpose.msra.mxu0 0.0
      %851 = vmatprep.subr.mxu0 0.0
      %852 = vmatpush1.xpose.msra.mxu0 0.0
      %853 = vmatprep.subr.mxu0 0.0
      %854 = vmatpush1.xpose.msra.mxu0 0.0
      %855 = vmatprep.subr.mxu0 0.0
      %856 = vmatpush1.xpose.msra.mxu0 0.0
      %857 = vmatprep.subr.mxu0 0.0
      %858 = vmatpush1.xpose.msra.mxu0 0.0
      %859 = vmatprep.subr.mxu0 0.0
      %860 = vmatpush1.xpose.msra.mxu0 0.0
      %861 = vmatprep.subr.mxu0 0.0
      %862 = vmatpush1.xpose.msra.mxu0 0.0
      %863 = vmatprep.subr.mxu0 0.0
      %864 = vmatpush1.xpose.msra.mxu0 0.0
      %865 = vmatprep.subr.mxu0 0.0
      %866 = vmatpush1.xpose.msra.mxu0 0.0
      %867 = vmatprep.subr.mxu0 0.0
      %868 = vmatpush1.xpose.msra.mxu0 0.0
      %869 = vmatprep.subr.mxu0 0.0
      %870 = vmatpush1.xpose.msra.mxu0 0.0
      %871 = vmatprep.subr.mxu0 0.0
      %872 = vmatpush1.xpose.msra.mxu0 0.0
      %873 = vmatprep.subr.mxu0 0.0
      %874 = vmatpush1.xpose.msra.mxu0 0.0
      %875 = vmatprep.subr.mxu0 0.0
      %876 = vmatpush1.xpose.msra.mxu0 0.0
      %877 = vmatprep.subr.mxu0 0.0
      %878 = vmatpush1.xpose.msra.mxu0 0.0
      %879 = vmatprep.subr.mxu0 0.0
      %880 = vmatpush1.xpose.msra.mxu0 0.0
      %881 = vmatprep.subr.mxu0 0.0
      %882 = vmatpush1.xpose.msra.mxu0 0.0
      %883 = vmatprep.subr.mxu0 0.0
      %884 = vmatpush1.xpose.msra.mxu0 0.0
      %885 = vmatprep.subr.mxu0 0.0
      %886 = vmatpush1.xpose.msra.mxu0 0.0
      %887 = vmatprep.subr.mxu0 0.0
      %888 = vmatpush1.xpose.msra.mxu0 0.0
      %889 = vmatprep.subr.mxu0 0.0
      %890 = vmatpush1.xpose.msra.mxu0 0.0
      %891 = vmatprep.subr.mxu0 0.0
      %892 = vmatpush1.xpose.msra.mxu0 0.0
      %893 = vmatprep.subr.mxu0 0.0
      %894 = vmatpush1.xpose.msra.mxu0 0.0
      %895 = vmatprep.mubr.f32.mxu0 0.0
      %896 = vmatmul.mubr.f32.gmra.mrb[0].mxu0 %v823
      %v897 = vpop.f32.mrb[0].mxu0
      %v898 = vadd.f32 0.0, %v897
      %v899 = vpop.f32.mrb[0].mxu0
      %900 = vmatprep.mubr.f32.mxu0 0.0
      %901 = vmatmul.mubr.f32.gmra.mrb[0].mxu0 %v825
      %v902 = vpop.f32.mrb[0].mxu0
      %v903 = vadd.f32 0.0, %v902
      %v904 = vpop.f32.mrb[0].mxu0
      %905 = vdwg.mxu0
      %v906 = vmul.f32 %v898, 0.35355338
      %v907 = vmul.f32 %v903, 0.35355338
      %vm908 = vcmask 130048
      %v909 = vsel %vm908, %v906, -inf
      %910 = vmax.xlane.f32.xlu0 %v909
      %v911 = vpop.xlane.xlu0 %910
      %v912 = vsel %vm908, %v907, -inf
      %913 = vmax.xlane.f32.xlu0 %v912
      %v914 = vpop.xlane.xlu0 %913
      %v915 = vsub.f32 %v906, %v911
      %v916 = vsub.f32 %v907, %v914
      %v917 = vmul.f32 %v915, 1.442695
      %v918 = vpow.pop %v917
      %v919 = vmul.f32 %v916, 1.442695
      %v920 = vpow.pop %v919
      %v921 = vsel %vm908, %v918, 0.0
      %922 = vadd.xlane.f32.xlu0 %v921
      %v923 = vpop.xlane.xlu0 %922
      %v924 = vsel %vm908, %v920, 0.0
      %925 = vadd.xlane.f32.xlu0 %v924
      %v926 = vpop.xlane.xlu0 %925
      %v927 = vrcp.pop %v923
      %v928 = vrcp.pop %v926
      %v929 = vmul.f32 %v918, %v927
      %v930 = vmul.f32 %v920, %v928
      %931 = vrot.lane.b32.xlu0 %v810, 64
      %v932 = vpop.permute.xlu0 %931
      %933 = vrot.lane.b32.xlu0 %v813, 64
      %v934 = vpop.permute.xlu0 %933
      %v938 = vsel %vm908, %v929, 0
      %v941 = vsel %vm908, %v930, 0
      %943 = vmatprep.subr.mxu0 0.0
      %944 = vmatpush1.msra.mxu0 %v932
      %945 = vmatprep.subr.mxu0 0.0
      %946 = vmatpush1.msra.mxu0 %v934
      %947 = vmatprep.subr.mxu0 0.0
      %948 = vmatpush1.msra.mxu0 0.0
      %949 = vmatprep.subr.mxu0 0.0
      %950 = vmatpush1.msra.mxu0 0.0
      %951 = vmatprep.subr.mxu0 0.0
      %952 = vmatpush1.msra.mxu0 0.0
      %953 = vmatprep.subr.mxu0 0.0
      %954 = vmatpush1.msra.mxu0 0.0
      %955 = vmatprep.subr.mxu0 0.0
      %956 = vmatpush1.msra.mxu0 0.0
      %957 = vmatprep.subr.mxu0 0.0
      %958 = vmatpush1.msra.mxu0 0.0
      %959 = vmatprep.subr.mxu0 0.0
      %960 = vmatpush1.msra.mxu0 0.0
      %961 = vmatprep.subr.mxu0 0.0
      %962 = vmatpush1.msra.mxu0 0.0
      %963 = vmatprep.subr.mxu0 0.0
      %964 = vmatpush1.msra.mxu0 0.0
      %965 = vmatprep.subr.mxu0 0.0
      %966 = vmatpush1.msra.mxu0 0.0
      %967 = vmatprep.subr.mxu0 0.0
      %968 = vmatpush1.msra.mxu0 0.0
      %969 = vmatprep.subr.mxu0 0.0
      %970 = vmatpush1.msra.mxu0 0.0
      %971 = vmatprep.subr.mxu0 0.0
      %972 = vmatpush1.msra.mxu0 0.0
      %973 = vmatprep.subr.mxu0 0.0
      %974 = vmatpush1.msra.mxu0 0.0
      %975 = vmatprep.subr.mxu0 0.0
      %976 = vmatpush1.msra.mxu0 0.0
      %977 = vmatprep.subr.mxu0 0.0
      %978 = vmatpush1.msra.mxu0 0.0
      %979 = vmatprep.subr.mxu0 0.0
      %980 = vmatpush1.msra.mxu0 0.0
      %981 = vmatprep.subr.mxu0 0.0
      %982 = vmatpush1.msra.mxu0 0.0
      %983 = vmatprep.subr.mxu0 0.0
      %984 = vmatpush1.msra.mxu0 0.0
      %985 = vmatprep.subr.mxu0 0.0
      %986 = vmatpush1.msra.mxu0 0.0
      %987 = vmatprep.subr.mxu0 0.0
      %988 = vmatpush1.msra.mxu0 0.0
      %989 = vmatprep.subr.mxu0 0.0
      %990 = vmatpush1.msra.mxu0 0.0
      %991 = vmatprep.subr.mxu0 0.0
      %992 = vmatpush1.msra.mxu0 0.0
      %993 = vmatprep.subr.mxu0 0.0
      %994 = vmatpush1.msra.mxu0 0.0
      %995 = vmatprep.subr.mxu0 0.0
      %996 = vmatpush1.msra.mxu0 0.0
      %997 = vmatprep.subr.mxu0 0.0
      %998 = vmatpush1.msra.mxu0 0.0
      %999 = vmatprep.subr.mxu0 0.0
      %1000 = vmatpush1.msra.mxu0 0.0
      %1001 = vmatprep.subr.mxu0 0.0
      %1002 = vmatpush1.msra.mxu0 0.0
      %1003 = vmatprep.subr.mxu0 0.0
      %1004 = vmatpush1.msra.mxu0 0.0
      %1005 = vmatprep.subr.mxu0 0.0
      %1006 = vmatpush1.msra.mxu0 0.0
      %1007 = vmatprep.mubr.f32.mxu0 0.0
      %1008 = vmatmul.mubr.f32.gmra.mrb[0].mxu0 %v938
      %v1009 = vpop.f32.mrb[0].mxu0
      %v1010 = vadd.f32 0.0, %v1009
      %v1011 = vpop.f32.mrb[0].mxu0
      %1012 = vmatprep.mubr.f32.mxu0 0.0
      %1013 = vmatmul.mubr.f32.gmra.mrb[0].mxu0 %v941
      %v1014 = vpop.f32.mrb[0].mxu0
      %v1015 = vadd.f32 0.0, %v1014
      %v1016 = vpop.f32.mrb[0].mxu0
      %1017 = vdwg.mxu0
      %v1018 = vpack.c.bf16 %v1015, %v1010
      %v1019 = vld [vmem:[%s7] sm:$0xf]
      %1020 = vrot.lane.b32.xlu0 %v810, 120
      %v1021 = vpop.permute.xlu0 %1020
      %1022 = vrot.lane.b32.xlu0 %v813, 120
      %v1023 = vpop.permute.xlu0 %1022
      %1024 = vrot.lane.b32.xlu0 %v810, 88
      %v1025 = vpop.permute.xlu0 %1024
      %1026 = vrot.lane.b32.xlu0 %v813, 88
      %v1027 = vpop.permute.xlu0 %1026
      %v1028 = vsel %vm822, %v1021, 0
      %v1030 = vsel %vm822, %v1023, 0
      %v1032 = vsel %vm822, %v1025, 0
      %v1034 = vsel %vm822, %v1027, 0
      %1036 = vmatprep.subr.mxu0 0.0
      %1037 = vmatpush1.xpose.msra.mxu0 %v1032
      %1038 = vmatprep.subr.mxu0 0.0
      %1039 = vmatpush1.xpose.msra.mxu0 %v1034
      %1040 = vmatprep.subr.mxu0 0.0
      %1041 = vmatpush1.xpose.msra.mxu0 0.0
      %1042 = vmatprep.subr.mxu0 0.0
      %1043 = vmatpush1.xpose.msra.mxu0 0.0
      %1044 = vmatprep.subr.mxu0 0.0
      %1045 = vmatpush1.xpose.msra.mxu0 0.0
      %1046 = vmatprep.subr.mxu0 0.0
      %1047 = vmatpush1.xpose.msra.mxu0 0.0
      %1048 = vmatprep.subr.mxu0 0.0
      %1049 = vmatpush1.xpose.msra.mxu0 0.0
      %1050 = vmatprep.subr.mxu0 0.0
      %1051 = vmatpush1.xpose.msra.mxu0 0.0
      %1052 = vmatprep.subr.mxu0 0.0
      %1053 = vmatpush1.xpose.msra.mxu0 0.0
      %1054 = vmatprep.subr.mxu0 0.0
      %1055 = vmatpush1.xpose.msra.mxu0 0.0
      %1056 = vmatprep.subr.mxu0 0.0
      %1057 = vmatpush1.xpose.msra.mxu0 0.0
      %1058 = vmatprep.subr.mxu0 0.0
      %1059 = vmatpush1.xpose.msra.mxu0 0.0
      %1060 = vmatprep.subr.mxu0 0.0
      %1061 = vmatpush1.xpose.msra.mxu0 0.0
      %1062 = vmatprep.subr.mxu0 0.0
      %1063 = vmatpush1.xpose.msra.mxu0 0.0
      %1064 = vmatprep.subr.mxu0 0.0
      %1065 = vmatpush1.xpose.msra.mxu0 0.0
      %1066 = vmatprep.subr.mxu0 0.0
      %1067 = vmatpush1.xpose.msra.mxu0 0.0
      %1068 = vmatprep.subr.mxu0 0.0
      %1069 = vmatpush1.xpose.msra.mxu0 0.0
      %1070 = vmatprep.subr.mxu0 0.0
      %1071 = vmatpush1.xpose.msra.mxu0 0.0
      %1072 = vmatprep.subr.mxu0 0.0
      %1073 = vmatpush1.xpose.msra.mxu0 0.0
      %1074 = vmatprep.subr.mxu0 0.0
      %1075 = vmatpush1.xpose.msra.mxu0 0.0
      %1076 = vmatprep.subr.mxu0 0.0
      %1077 = vmatpush1.xpose.msra.mxu0 0.0
      %1078 = vmatprep.subr.mxu0 0.0
      %1079 = vmatpush1.xpose.msra.mxu0 0.0
      %1080 = vmatprep.subr.mxu0 0.0
      %1081 = vmatpush1.xpose.msra.mxu0 0.0
      %1082 = vmatprep.subr.mxu0 0.0
      %1083 = vmatpush1.xpose.msra.mxu0 0.0
      %1084 = vmatprep.subr.mxu0 0.0
      %1085 = vmatpush1.xpose.msra.mxu0 0.0
      %1086 = vmatprep.subr.mxu0 0.0
      %1087 = vmatpush1.xpose.msra.mxu0 0.0
      %1088 = vmatprep.subr.mxu0 0.0
      %1089 = vmatpush1.xpose.msra.mxu0 0.0
      %1090 = vmatprep.subr.mxu0 0.0
      %1091 = vmatpush1.xpose.msra.mxu0 0.0
      %1092 = vmatprep.subr.mxu0 0.0
      %1093 = vmatpush1.xpose.msra.mxu0 0.0
      %1094 = vmatprep.subr.mxu0 0.0
      %1095 = vmatpush1.xpose.msra.mxu0 0.0
      %1096 = vmatprep.subr.mxu0 0.0
      %1097 = vmatpush1.xpose.msra.mxu0 0.0
      %1098 = vmatprep.subr.mxu0 0.0
      %1099 = vmatpush1.xpose.msra.mxu0 0.0
      %1100 = vmatprep.mubr.f32.mxu0 0.0
      %1101 = vmatmul.mubr.f32.gmra.mrb[0].mxu0 %v1028
      %v1102 = vpop.f32.mrb[0].mxu0
      %v1103 = vadd.f32 0.0, %v1102
      %v1104 = vpop.f32.mrb[0].mxu0
      %1105 = vmatprep.mubr.f32.mxu0 0.0
      %1106 = vmatmul.mubr.f32.gmra.mrb[0].mxu0 %v1030
      %v1107 = vpop.f32.mrb[0].mxu0
      %v1108 = vadd.f32 0.0, %v1107
      %v1109 = vpop.f32.mrb[0].mxu0
      %1110 = vdwg.mxu0
      %v1111 = vmul.f32 %v1103, 0.35355338
      %v1112 = vmul.f32 %v1108, 0.35355338
      %v1113 = vsel %vm908, %v1111, -inf
      %1114 = vmax.xlane.f32.xlu0 %v1113
      %v1115 = vpop.xlane.xlu0 %1114
      %v1116 = vsel %vm908, %v1112, -inf
      %1117 = vmax.xlane.f32.xlu0 %v1116
      %v1118 = vpop.xlane.xlu0 %1117
      %v1119 = vsub.f32 %v1111, %v1115
      %v1120 = vsub.f32 %v1112, %v1118
      %v1121 = vmul.f32 %v1119, 1.442695
      %v1122 = vpow.pop %v1121
      %v1123 = vmul.f32 %v1120, 1.442695
      %v1124 = vpow.pop %v1123
      %v1125 = vsel %vm908, %v1122, 0.0
      %1126 = vadd.xlane.f32.xlu0 %v1125
      %v1127 = vpop.xlane.xlu0 %1126
      %v1128 = vsel %vm908, %v1124, 0.0
      %1129 = vadd.xlane.f32.xlu0 %v1128
      %v1130 = vpop.xlane.xlu0 %1129
      %v1131 = vrcp.pop %v1127
      %v1132 = vrcp.pop %v1130
      %v1133 = vmul.f32 %v1122, %v1131
      %v1134 = vmul.f32 %v1124, %v1132
      %1135 = vrot.lane.b32.xlu0 %v810, 56
      %v1136 = vpop.permute.xlu0 %1135
      %1137 = vrot.lane.b32.xlu0 %v813, 56
      %v1138 = vpop.permute.xlu0 %1137
      %v1142 = vsel %vm908, %v1133, 0
      %v1145 = vsel %vm908, %v1134, 0
      %1147 = vmatprep.subr.mxu0 0.0
      %1148 = vmatpush1.msra.mxu0 %v1136
      %1149 = vmatprep.subr.mxu0 0.0
      %1150 = vmatpush1.msra.mxu0 %v1138
      %1151 = vmatprep.subr.mxu0 0.0
      %1152 = vmatpush1.msra.mxu0 0.0
      %1153 = vmatprep.subr.mxu0 0.0
      %1154 = vmatpush1.msra.mxu0 0.0
      %1155 = vmatprep.subr.mxu0 0.0
      %1156 = vmatpush1.msra.mxu0 0.0
      %1157 = vmatprep.subr.mxu0 0.0
      %1158 = vmatpush1.msra.mxu0 0.0
      %1159 = vmatprep.subr.mxu0 0.0
      %1160 = vmatpush1.msra.mxu0 0.0
      %1161 = vmatprep.subr.mxu0 0.0
      %1162 = vmatpush1.msra.mxu0 0.0
      %1163 = vmatprep.subr.mxu0 0.0
      %1164 = vmatpush1.msra.mxu0 0.0
      %1165 = vmatprep.subr.mxu0 0.0
      %1166 = vmatpush1.msra.mxu0 0.0
      %1167 = vmatprep.subr.mxu0 0.0
      %1168 = vmatpush1.msra.mxu0 0.0
      %1169 = vmatprep.subr.mxu0 0.0
      %1170 = vmatpush1.msra.mxu0 0.0
      %1171 = vmatprep.subr.mxu0 0.0
      %1172 = vmatpush1.msra.mxu0 0.0
      %1173 = vmatprep.subr.mxu0 0.0
      %1174 = vmatpush1.msra.mxu0 0.0
      %1175 = vmatprep.subr.mxu0 0.0
      %1176 = vmatpush1.msra.mxu0 0.0
      %1177 = vmatprep.subr.mxu0 0.0
      %1178 = vmatpush1.msra.mxu0 0.0
      %1179 = vmatprep.subr.mxu0 0.0
      %1180 = vmatpush1.msra.mxu0 0.0
      %1181 = vmatprep.subr.mxu0 0.0
      %1182 = vmatpush1.msra.mxu0 0.0
      %1183 = vmatprep.subr.mxu0 0.0
      %1184 = vmatpush1.msra.mxu0 0.0
      %1185 = vmatprep.subr.mxu0 0.0
      %1186 = vmatpush1.msra.mxu0 0.0
      %1187 = vmatprep.subr.mxu0 0.0
      %1188 = vmatpush1.msra.mxu0 0.0
      %1189 = vmatprep.subr.mxu0 0.0
      %1190 = vmatpush1.msra.mxu0 0.0
      %1191 = vmatprep.subr.mxu0 0.0
      %1192 = vmatpush1.msra.mxu0 0.0
      %1193 = vmatprep.subr.mxu0 0.0
      %1194 = vmatpush1.msra.mxu0 0.0
      %1195 = vmatprep.subr.mxu0 0.0
      %1196 = vmatpush1.msra.mxu0 0.0
      %1197 = vmatprep.subr.mxu0 0.0
      %1198 = vmatpush1.msra.mxu0 0.0
      %1199 = vmatprep.subr.mxu0 0.0
      %1200 = vmatpush1.msra.mxu0 0.0
      %1201 = vmatprep.subr.mxu0 0.0
      %1202 = vmatpush1.msra.mxu0 0.0
      %1203 = vmatprep.subr.mxu0 0.0
      %1204 = vmatpush1.msra.mxu0 0.0
      %1205 = vmatprep.subr.mxu0 0.0
      %1206 = vmatpush1.msra.mxu0 0.0
      %1207 = vmatprep.subr.mxu0 0.0
      %1208 = vmatpush1.msra.mxu0 0.0
      %1209 = vmatprep.subr.mxu0 0.0
      %1210 = vmatpush1.msra.mxu0 0.0
      %1211 = vmatprep.mubr.f32.mxu0 0.0
      %1212 = vmatmul.mubr.f32.gmra.mrb[0].mxu0 %v1142
      %v1213 = vpop.f32.mrb[0].mxu0
      %v1214 = vadd.f32 0.0, %v1213
      %v1215 = vpop.f32.mrb[0].mxu0
      %1216 = vmatprep.mubr.f32.mxu0 0.0
      %1217 = vmatmul.mubr.f32.gmra.mrb[0].mxu0 %v1145
      %v1218 = vpop.f32.mrb[0].mxu0
      %v1219 = vadd.f32 0.0, %v1218
      %v1220 = vpop.f32.mrb[0].mxu0
      %1221 = vdwg.mxu0
      %v1222 = vpack.c.bf16 %v1219, %v1214
      %v1223 = vld [vmem:[%s7 + $0x4] sm:$0xf]
      %v1225 = vsel %vm822, %v1222, 0
      %vm1227 = vcmask 1043456
      %v1229 = vsel %vm1227, %v1223, 0
      %1231 = vmatprep.subr.bf16.mxu0 0
      %1232 = vmatpush1.bf16.msra.mxu0 %v1229
      %1233 = vmatprep.subr.bf16.mxu0 0
      %1234 = vmatpush1.bf16.msra.mxu0 0
      %1235 = vmatprep.subr.bf16.mxu0 0
      %1236 = vmatpush1.bf16.msra.mxu0 0
      %1237 = vmatprep.subr.bf16.mxu0 0
      %1238 = vmatpush1.bf16.msra.mxu0 0
      %1239 = vmatprep.subr.bf16.mxu0 0
      %1240 = vmatpush1.bf16.msra.mxu0 0
      %1241 = vmatprep.subr.bf16.mxu0 0
      %1242 = vmatpush1.bf16.msra.mxu0 0
      %1243 = vmatprep.subr.bf16.mxu0 0
      %1244 = vmatpush1.bf16.msra.mxu0 0
      %1245 = vmatprep.subr.bf16.mxu0 0
      %1246 = vmatpush1.bf16.msra.mxu0 0
      %1247 = vmatprep.subr.bf16.mxu0 0
      %1248 = vmatpush1.bf16.msra.mxu0 0
      %1249 = vmatprep.subr.bf16.mxu0 0
      %1250 = vmatpush1.bf16.msra.mxu0 0
      %1251 = vmatprep.subr.bf16.mxu0 0
      %1252 = vmatpush1.bf16.msra.mxu0 0
      %1253 = vmatprep.subr.bf16.mxu0 0
      %1254 = vmatpush1.bf16.msra.mxu0 0
      %1255 = vmatprep.subr.bf16.mxu0 0
      %1256 = vmatpush1.bf16.msra.mxu0 0
      %1257 = vmatprep.subr.bf16.mxu0 0
      %1258 = vmatpush1.bf16.msra.mxu0 0
      %1259 = vmatprep.subr.bf16.mxu0 0
      %1260 = vmatpush1.bf16.msra.mxu0 0
      %1261 = vmatprep.subr.bf16.mxu0 0
      %1262 = vmatpush1.bf16.msra.mxu0 0
      %1263 = vmatprep.mubr.bf16.mxu0 0
      %1264 = vmatmul.mubr.bf16.gmra.mrb[0].mxu0 %v1225
      %v1265 = vpop.f32.mrb[0].mxu0
      %v1266 = vadd.f32 0.0, %v1265
      %v1267 = vpop.f32.mrb[0].mxu0
      %v1268 = vpop.f32.mrb[0].mxu0
      %v1269 = vadd.f32 0.0, %v1268
      %v1270 = vpop.f32.mrb[0].mxu0
      %1271 = vdwg.mxu0
      %v1273 = vsel %vm822, %v1018, 0
      %v1276 = vsel %vm1227, %v1019, 0
      %1278 = vmatprep.subr.bf16.mxu0 0
      %1279 = vmatpush1.bf16.msra.mxu0 %v1276
      %1280 = vmatprep.subr.bf16.mxu0 0
      %1281 = vmatpush1.bf16.msra.mxu0 0
      %1282 = vmatprep.subr.bf16.mxu0 0
      %1283 = vmatpush1.bf16.msra.mxu0 0
      %1284 = vmatprep.subr.bf16.mxu0 0
      %1285 = vmatpush1.bf16.msra.mxu0 0
      %1286 = vmatprep.subr.bf16.mxu0 0
      %1287 = vmatpush1.bf16.msra.mxu0 0
      %1288 = vmatprep.subr.bf16.mxu0 0
      %1289 = vmatpush1.bf16.msra.mxu0 0
      %1290 = vmatprep.subr.bf16.mxu0 0
      %1291 = vmatpush1.bf16.msra.mxu0 0
      %1292 = vmatprep.subr.bf16.mxu0 0
      %1293 = vmatpush1.bf16.msra.mxu0 0
      %1294 = vmatprep.subr.bf16.mxu0 0
      %1295 = vmatpush1.bf16.msra.mxu0 0
      %1296 = vmatprep.subr.bf16.mxu0 0
      %1297 = vmatpush1.bf16.msra.mxu0 0
      %1298 = vmatprep.subr.bf16.mxu0 0
      %1299 = vmatpush1.bf16.msra.mxu0 0
      %1300 = vmatprep.subr.bf16.mxu0 0
      %1301 = vmatpush1.bf16.msra.mxu0 0
      %1302 = vmatprep.subr.bf16.mxu0 0
      %1303 = vmatpush1.bf16.msra.mxu0 0
      %1304 = vmatprep.subr.bf16.mxu0 0
      %1305 = vmatpush1.bf16.msra.mxu0 0
      %1306 = vmatprep.subr.bf16.mxu0 0
      %1307 = vmatpush1.bf16.msra.mxu0 0
      %1308 = vmatprep.subr.bf16.mxu0 0
      %1309 = vmatpush1.bf16.msra.mxu0 0
      %1310 = vmatprep.mubr.bf16.mxu0 0
      %1311 = vmatmul.mubr.bf16.gmra.mrb[0].mxu0 %v1273
      %v1312 = vpop.f32.mrb[0].mxu0
      %v1313 = vadd.f32 %v1266, %v1312
      %v1314 = vpop.f32.mrb[0].mxu0
      %v1315 = vpop.f32.mrb[0].mxu0
      %v1316 = vadd.f32 %v1269, %v1315
      %v1317 = vpop.f32.mrb[0].mxu0
      %1318 = vdwg.mxu0
      %1319 = vrot.lane.b32.xlu0 %v810, 112
      %v1320 = vpop.permute.xlu0 %1319
      %1321 = vrot.lane.b32.xlu0 %v813, 112
      %v1322 = vpop.permute.xlu0 %1321
      %1323 = vrot.lane.b32.xlu0 %v810, 80
      %v1324 = vpop.permute.xlu0 %1323
      %1325 = vrot.lane.b32.xlu0 %v813, 80
      %v1326 = vpop.permute.xlu0 %1325
      %v1327 = vsel %vm822, %v1320, 0
      %v1329 = vsel %vm822, %v1322, 0
      %v1331 = vsel %vm822, %v1324, 0
      %v1333 = vsel %vm822, %v1326, 0
      %1335 = vmatprep.subr.mxu0 0.0
      %1336 = vmatpush1.xpose.msra.mxu0 %v1331
      %1337 = vmatprep.subr.mxu0 0.0
      %1338 = vmatpush1.xpose.msra.mxu0 %v1333
      %1339 = vmatprep.subr.mxu0 0.0
      %1340 = vmatpush1.xpose.msra.mxu0 0.0
      %1341 = vmatprep.subr.mxu0 0.0
      %1342 = vmatpush1.xpose.msra.mxu0 0.0
      %1343 = vmatprep.subr.mxu0 0.0
      %1344 = vmatpush1.xpose.msra.mxu0 0.0
      %1345 = vmatprep.subr.mxu0 0.0
      %1346 = vmatpush1.xpose.msra.mxu0 0.0
      %1347 = vmatprep.subr.mxu0 0.0
      %1348 = vmatpush1.xpose.msra.mxu0 0.0
      %1349 = vmatprep.subr.mxu0 0.0
      %1350 = vmatpush1.xpose.msra.mxu0 0.0
      %1351 = vmatprep.subr.mxu0 0.0
      %1352 = vmatpush1.xpose.msra.mxu0 0.0
      %1353 = vmatprep.subr.mxu0 0.0
      %1354 = vmatpush1.xpose.msra.mxu0 0.0
      %1355 = vmatprep.subr.mxu0 0.0
      %1356 = vmatpush1.xpose.msra.mxu0 0.0
      %1357 = vmatprep.subr.mxu0 0.0
      %1358 = vmatpush1.xpose.msra.mxu0 0.0
      %1359 = vmatprep.subr.mxu0 0.0
      %1360 = vmatpush1.xpose.msra.mxu0 0.0
      %1361 = vmatprep.subr.mxu0 0.0
      %1362 = vmatpush1.xpose.msra.mxu0 0.0
      %1363 = vmatprep.subr.mxu0 0.0
      %1364 = vmatpush1.xpose.msra.mxu0 0.0
      %1365 = vmatprep.subr.mxu0 0.0
      %1366 = vmatpush1.xpose.msra.mxu0 0.0
      %1367 = vmatprep.subr.mxu0 0.0
      %1368 = vmatpush1.xpose.msra.mxu0 0.0
      %1369 = vmatprep.subr.mxu0 0.0
      %1370 = vmatpush1.xpose.msra.mxu0 0.0
      %1371 = vmatprep.subr.mxu0 0.0
      %1372 = vmatpush1.xpose.msra.mxu0 0.0
      %1373 = vmatprep.subr.mxu0 0.0
      %1374 = vmatpush1.xpose.msra.mxu0 0.0
      %1375 = vmatprep.subr.mxu0 0.0
      %1376 = vmatpush1.xpose.msra.mxu0 0.0
      %1377 = vmatprep.subr.mxu0 0.0
      %1378 = vmatpush1.xpose.msra.mxu0 0.0
      %1379 = vmatprep.subr.mxu0 0.0
      %1380 = vmatpush1.xpose.msra.mxu0 0.0
      %1381 = vmatprep.subr.mxu0 0.0
      %1382 = vmatpush1.xpose.msra.mxu0 0.0
      %1383 = vmatprep.subr.mxu0 0.0
      %1384 = vmatpush1.xpose.msra.mxu0 0.0
      %1385 = vmatprep.subr.mxu0 0.0
      %1386 = vmatpush1.xpose.msra.mxu0 0.0
      %1387 = vmatprep.subr.mxu0 0.0
      %1388 = vmatpush1.xpose.msra.mxu0 0.0
      %1389 = vmatprep.subr.mxu0 0.0
      %1390 = vmatpush1.xpose.msra.mxu0 0.0
      %1391 = vmatprep.subr.mxu0 0.0
      %1392 = vmatpush1.xpose.msra.mxu0 0.0
      %1393 = vmatprep.subr.mxu0 0.0
      %1394 = vmatpush1.xpose.msra.mxu0 0.0
      %1395 = vmatprep.subr.mxu0 0.0
      %1396 = vmatpush1.xpose.msra.mxu0 0.0
      %1397 = vmatprep.subr.mxu0 0.0
      %1398 = vmatpush1.xpose.msra.mxu0 0.0
      %1399 = vmatprep.mubr.f32.mxu0 0.0
      %1400 = vmatmul.mubr.f32.gmra.mrb[0].mxu0 %v1327
      %v1401 = vpop.f32.mrb[0].mxu0
      %v1402 = vadd.f32 0.0, %v1401
      %v1403 = vpop.f32.mrb[0].mxu0
      %1404 = vmatprep.mubr.f32.mxu0 0.0
      %1405 = vmatmul.mubr.f32.gmra.mrb[0].mxu0 %v1329
      %v1406 = vpop.f32.mrb[0].mxu0
      %v1407 = vadd.f32 0.0, %v1406
      %v1408 = vpop.f32.mrb[0].mxu0
      %1409 = vdwg.mxu0
      %v1410 = vmul.f32 %v1402, 0.35355338
      %v1411 = vmul.f32 %v1407, 0.35355338
      %v1412 = vsel %vm908, %v1410, -inf
      %1413 = vmax.xlane.f32.xlu0 %v1412
      %v1414 = vpop.xlane.xlu0 %1413
      %v1415 = vsel %vm908, %v1411, -inf
      %1416 = vmax.xlane.f32.xlu0 %v1415
      %v1417 = vpop.xlane.xlu0 %1416
      %v1418 = vsub.f32 %v1410, %v1414
      %v1419 = vsub.f32 %v1411, %v1417
      %v1420 = vmul.f32 %v1418, 1.442695
      %v1421 = vpow.pop %v1420
      %v1422 = vmul.f32 %v1419, 1.442695
      %v1423 = vpow.pop %v1422
      %v1424 = vsel %vm908, %v1421, 0.0
      %1425 = vadd.xlane.f32.xlu0 %v1424
      %v1426 = vpop.xlane.xlu0 %1425
      %v1427 = vsel %vm908, %v1423, 0.0
      %1428 = vadd.xlane.f32.xlu0 %v1427
      %v1429 = vpop.xlane.xlu0 %1428
      %v1430 = vrcp.pop %v1426
      %v1431 = vrcp.pop %v1429
      %v1432 = vmul.f32 %v1421, %v1430
      %v1433 = vmul.f32 %v1423, %v1431
      %1434 = vrot.lane.b32.xlu0 %v810, 48
      %v1435 = vpop.permute.xlu0 %1434
      %1436 = vrot.lane.b32.xlu0 %v813, 48
      %v1437 = vpop.permute.xlu0 %1436
      %v1441 = vsel %vm908, %v1432, 0
      %v1444 = vsel %vm908, %v1433, 0
      %1446 = vmatprep.subr.mxu0 0.0
      %1447 = vmatpush1.msra.mxu0 %v1435
      %1448 = vmatprep.subr.mxu0 0.0
      %1449 = vmatpush1.msra.mxu0 %v1437
      %1450 = vmatprep.subr.mxu0 0.0
      %1451 = vmatpush1.msra.mxu0 0.0
      %1452 = vmatprep.subr.mxu0 0.0
      %1453 = vmatpush1.msra.mxu0 0.0
      %1454 = vmatprep.subr.mxu0 0.0
      %1455 = vmatpush1.msra.mxu0 0.0
      %1456 = vmatprep.subr.mxu0 0.0
      %1457 = vmatpush1.msra.mxu0 0.0
      %1458 = vmatprep.subr.mxu0 0.0
      %1459 = vmatpush1.msra.mxu0 0.0
      %1460 = vmatprep.subr.mxu0 0.0
      %1461 = vmatpush1.msra.mxu0 0.0
      %1462 = vmatprep.subr.mxu0 0.0
      %1463 = vmatpush1.msra.mxu0 0.0
      %1464 = vmatprep.subr.mxu0 0.0
      %1465 = vmatpush1.msra.mxu0 0.0
      %1466 = vmatprep.subr.mxu0 0.0
      %1467 = vmatpush1.msra.mxu0 0.0
      %1468 = vmatprep.subr.mxu0 0.0
      %1469 = vmatpush1.msra.mxu0 0.0
      %1470 = vmatprep.subr.mxu0 0.0
      %1471 = vmatpush1.msra.mxu0 0.0
      %1472 = vmatprep.subr.mxu0 0.0
      %1473 = vmatpush1.msra.mxu0 0.0
      %1474 = vmatprep.subr.mxu0 0.0
      %1475 = vmatpush1.msra.mxu0 0.0
      %1476 = vmatprep.subr.mxu0 0.0
      %1477 = vmatpush1.msra.mxu0 0.0
      %1478 = vmatprep.subr.mxu0 0.0
      %1479 = vmatpush1.msra.mxu0 0.0
      %1480 = vmatprep.subr.mxu0 0.0
      %1481 = vmatpush1.msra.mxu0 0.0
      %1482 = vmatprep.subr.mxu0 0.0
      %1483 = vmatpush1.msra.mxu0 0.0
      %1484 = vmatprep.subr.mxu0 0.0
      %1485 = vmatpush1.msra.mxu0 0.0
      %1486 = vmatprep.subr.mxu0 0.0
      %1487 = vmatpush1.msra.mxu0 0.0
      %1488 = vmatprep.subr.mxu0 0.0
      %1489 = vmatpush1.msra.mxu0 0.0
      %1490 = vmatprep.subr.mxu0 0.0
      %1491 = vmatpush1.msra.mxu0 0.0
      %1492 = vmatprep.subr.mxu0 0.0
      %1493 = vmatpush1.msra.mxu0 0.0
      %1494 = vmatprep.subr.mxu0 0.0
      %1495 = vmatpush1.msra.mxu0 0.0
      %1496 = vmatprep.subr.mxu0 0.0
      %1497 = vmatpush1.msra.mxu0 0.0
      %1498 = vmatprep.subr.mxu0 0.0
      %1499 = vmatpush1.msra.mxu0 0.0
      %1500 = vmatprep.subr.mxu0 0.0
      %1501 = vmatpush1.msra.mxu0 0.0
      %1502 = vmatprep.subr.mxu0 0.0
      %1503 = vmatpush1.msra.mxu0 0.0
      %1504 = vmatprep.subr.mxu0 0.0
      %1505 = vmatpush1.msra.mxu0 0.0
      %1506 = vmatprep.subr.mxu0 0.0
      %1507 = vmatpush1.msra.mxu0 0.0
      %1508 = vmatprep.subr.mxu0 0.0
      %1509 = vmatpush1.msra.mxu0 0.0
      %1510 = vmatprep.mubr.f32.mxu0 0.0
      %1511 = vmatmul.mubr.f32.gmra.mrb[0].mxu0 %v1441
      %v1512 = vpop.f32.mrb[0].mxu0
      %v1513 = vadd.f32 0.0, %v1512
      %v1514 = vpop.f32.mrb[0].mxu0
      %1515 = vmatprep.mubr.f32.mxu0 0.0
      %1516 = vmatmul.mubr.f32.gmra.mrb[0].mxu0 %v1444
      %v1517 = vpop.f32.mrb[0].mxu0
      %v1518 = vadd.f32 0.0, %v1517
      %v1519 = vpop.f32.mrb[0].mxu0
      %1520 = vdwg.mxu0
      %v1521 = vpack.c.bf16 %v1518, %v1513
      %v1522 = vld [vmem:[%s7 + $0x8] sm:$0xf]
      %v1524 = vsel %vm822, %v1521, 0
      %v1527 = vsel %vm1227, %v1522, 0
      %1529 = vmatprep.subr.bf16.mxu0 0
      %1530 = vmatpush1.bf16.msra.mxu0 %v1527
      %1531 = vmatprep.subr.bf16.mxu0 0
      %1532 = vmatpush1.bf16.msra.mxu0 0
      %1533 = vmatprep.subr.bf16.mxu0 0
      %1534 = vmatpush1.bf16.msra.mxu0 0
      %1535 = vmatprep.subr.bf16.mxu0 0
      %1536 = vmatpush1.bf16.msra.mxu0 0
      %1537 = vmatprep.subr.bf16.mxu0 0
      %1538 = vmatpush1.bf16.msra.mxu0 0
      %1539 = vmatprep.subr.bf16.mxu0 0
      %1540 = vmatpush1.bf16.msra.mxu0 0
      %1541 = vmatprep.subr.bf16.mxu0 0
      %1542 = vmatpush1.bf16.msra.mxu0 0
      %1543 = vmatprep.subr.bf16.mxu0 0
      %1544 = vmatpush1.bf16.msra.mxu0 0
      %1545 = vmatprep.subr.bf16.mxu0 0
      %1546 = vmatpush1.bf16.msra.mxu0 0
      %1547 = vmatprep.subr.bf16.mxu0 0
      %1548 = vmatpush1.bf16.msra.mxu0 0
      %1549 = vmatprep.subr.bf16.mxu0 0
      %1550 = vmatpush1.bf16.msra.mxu0 0
      %1551 = vmatprep.subr.bf16.mxu0 0
      %1552 = vmatpush1.bf16.msra.mxu0 0
      %1553 = vmatprep.subr.bf16.mxu0 0
      %1554 = vmatpush1.bf16.msra.mxu0 0
      %1555 = vmatprep.subr.bf16.mxu0 0
      %1556 = vmatpush1.bf16.msra.mxu0 0
      %1557 = vmatprep.subr.bf16.mxu0 0
      %1558 = vmatpush1.bf16.msra.mxu0 0
      %1559 = vmatprep.subr.bf16.mxu0 0
      %1560 = vmatpush1.bf16.msra.mxu0 0
      %1561 = vmatprep.mubr.bf16.mxu0 0
      %1562 = vmatmul.mubr.bf16.gmra.mrb[0].mxu0 %v1524
      %v1563 = vpop.f32.mrb[0].mxu0
      %v1564 = vadd.f32 0.0, %v1563
      %v1565 = vpop.f32.mrb[0].mxu0
      %v1566 = vpop.f32.mrb[0].mxu0
      %v1567 = vadd.f32 0.0, %v1566
      %v1568 = vpop.f32.mrb[0].mxu0
      %1569 = vdwg.mxu0
      %v1570 = vadd.f32 %v1313, %v1564
      %v1571 = vadd.f32 %v1316, %v1567
      %1572 = vrot.lane.b32.xlu0 %v810, 104
      %v1573 = vpop.permute.xlu0 %1572
      %1574 = vrot.lane.b32.xlu0 %v813, 104
      %v1575 = vpop.permute.xlu0 %1574
      %1576 = vrot.lane.b32.xlu0 %v810, 72
      %v1577 = vpop.permute.xlu0 %1576
      %1578 = vrot.lane.b32.xlu0 %v813, 72
      %v1579 = vpop.permute.xlu0 %1578
      %v1580 = vsel %vm822, %v1573, 0
      %v1582 = vsel %vm822, %v1575, 0
      %v1584 = vsel %vm822, %v1577, 0
      %v1586 = vsel %vm822, %v1579, 0
      %1588 = vmatprep.subr.mxu0 0.0
      %1589 = vmatpush1.xpose.msra.mxu0 %v1584
      %1590 = vmatprep.subr.mxu0 0.0
      %1591 = vmatpush1.xpose.msra.mxu0 %v1586
      %1592 = vmatprep.subr.mxu0 0.0
      %1593 = vmatpush1.xpose.msra.mxu0 0.0
      %1594 = vmatprep.subr.mxu0 0.0
      %1595 = vmatpush1.xpose.msra.mxu0 0.0
      %1596 = vmatprep.subr.mxu0 0.0
      %1597 = vmatpush1.xpose.msra.mxu0 0.0
      %1598 = vmatprep.subr.mxu0 0.0
      %1599 = vmatpush1.xpose.msra.mxu0 0.0
      %1600 = vmatprep.subr.mxu0 0.0
      %1601 = vmatpush1.xpose.msra.mxu0 0.0
      %1602 = vmatprep.subr.mxu0 0.0
      %1603 = vmatpush1.xpose.msra.mxu0 0.0
      %1604 = vmatprep.subr.mxu0 0.0
      %1605 = vmatpush1.xpose.msra.mxu0 0.0
      %1606 = vmatprep.subr.mxu0 0.0
      %1607 = vmatpush1.xpose.msra.mxu0 0.0
      %1608 = vmatprep.subr.mxu0 0.0
      %1609 = vmatpush1.xpose.msra.mxu0 0.0
      %1610 = vmatprep.subr.mxu0 0.0
      %1611 = vmatpush1.xpose.msra.mxu0 0.0
      %1612 = vmatprep.subr.mxu0 0.0
      %1613 = vmatpush1.xpose.msra.mxu0 0.0
      %1614 = vmatprep.subr.mxu0 0.0
      %1615 = vmatpush1.xpose.msra.mxu0 0.0
      %1616 = vmatprep.subr.mxu0 0.0
      %1617 = vmatpush1.xpose.msra.mxu0 0.0
      %1618 = vmatprep.subr.mxu0 0.0
      %1619 = vmatpush1.xpose.msra.mxu0 0.0
      %1620 = vmatprep.subr.mxu0 0.0
      %1621 = vmatpush1.xpose.msra.mxu0 0.0
      %1622 = vmatprep.subr.mxu0 0.0
      %1623 = vmatpush1.xpose.msra.mxu0 0.0
      %1624 = vmatprep.subr.mxu0 0.0
      %1625 = vmatpush1.xpose.msra.mxu0 0.0
      %1626 = vmatprep.subr.mxu0 0.0
      %1627 = vmatpush1.xpose.msra.mxu0 0.0
      %1628 = vmatprep.subr.mxu0 0.0
      %1629 = vmatpush1.xpose.msra.mxu0 0.0
      %1630 = vmatprep.subr.mxu0 0.0
      %1631 = vmatpush1.xpose.msra.mxu0 0.0
      %1632 = vmatprep.subr.mxu0 0.0
      %1633 = vmatpush1.xpose.msra.mxu0 0.0
      %1634 = vmatprep.subr.mxu0 0.0
      %1635 = vmatpush1.xpose.msra.mxu0 0.0
      %1636 = vmatprep.subr.mxu0 0.0
      %1637 = vmatpush1.xpose.msra.mxu0 0.0
      %1638 = vmatprep.subr.mxu0 0.0
      %1639 = vmatpush1.xpose.msra.mxu0 0.0
      %1640 = vmatprep.subr.mxu0 0.0
      %1641 = vmatpush1.xpose.msra.mxu0 0.0
      %1642 = vmatprep.subr.mxu0 0.0
      %1643 = vmatpush1.xpose.msra.mxu0 0.0
      %1644 = vmatprep.subr.mxu0 0.0
      %1645 = vmatpush1.xpose.msra.mxu0 0.0
      %1646 = vmatprep.subr.mxu0 0.0
      %1647 = vmatpush1.xpose.msra.mxu0 0.0
      %1648 = vmatprep.subr.mxu0 0.0
      %1649 = vmatpush1.xpose.msra.mxu0 0.0
      %1650 = vmatprep.subr.mxu0 0.0
      %1651 = vmatpush1.xpose.msra.mxu0 0.0
      %1652 = vmatprep.mubr.f32.mxu0 0.0
      %1653 = vmatmul.mubr.f32.gmra.mrb[0].mxu0 %v1580
      %v1654 = vpop.f32.mrb[0].mxu0
      %v1655 = vadd.f32 0.0, %v1654
      %v1656 = vpop.f32.mrb[0].mxu0
      %1657 = vmatprep.mubr.f32.mxu0 0.0
      %1658 = vmatmul.mubr.f32.gmra.mrb[0].mxu0 %v1582
      %v1659 = vpop.f32.mrb[0].mxu0
      %v1660 = vadd.f32 0.0, %v1659
      %v1661 = vpop.f32.mrb[0].mxu0
      %1662 = vdwg.mxu0
      %v1663 = vmul.f32 %v1655, 0.35355338
      %v1664 = vmul.f32 %v1660, 0.35355338
      %v1665 = vsel %vm908, %v1663, -inf
      %1666 = vmax.xlane.f32.xlu0 %v1665
      %v1667 = vpop.xlane.xlu0 %1666
      %v1668 = vsel %vm908, %v1664, -inf
      %1669 = vmax.xlane.f32.xlu0 %v1668
      %v1670 = vpop.xlane.xlu0 %1669
      %v1671 = vsub.f32 %v1663, %v1667
      %v1672 = vsub.f32 %v1664, %v1670
      %v1673 = vmul.f32 %v1671, 1.442695
      %v1674 = vpow.pop %v1673
      %v1675 = vmul.f32 %v1672, 1.442695
      %v1676 = vpow.pop %v1675
      %v1677 = vsel %vm908, %v1674, 0.0
      %1678 = vadd.xlane.f32.xlu0 %v1677
      %v1679 = vpop.xlane.xlu0 %1678
      %v1680 = vsel %vm908, %v1676, 0.0
      %1681 = vadd.xlane.f32.xlu0 %v1680
      %v1682 = vpop.xlane.xlu0 %1681
      %v1683 = vrcp.pop %v1679
      %v1684 = vrcp.pop %v1682
      %v1685 = vmul.f32 %v1674, %v1683
      %v1686 = vmul.f32 %v1676, %v1684
      %1687 = vrot.lane.b32.xlu0 %v810, 40
      %v1688 = vpop.permute.xlu0 %1687
      %1689 = vrot.lane.b32.xlu0 %v813, 40
      %v1690 = vpop.permute.xlu0 %1689
      %v1694 = vsel %vm908, %v1685, 0
      %v1697 = vsel %vm908, %v1686, 0
      %1699 = vmatprep.subr.mxu0 0.0
      %1700 = vmatpush1.msra.mxu0 %v1688
      %1701 = vmatprep.subr.mxu0 0.0
      %1702 = vmatpush1.msra.mxu0 %v1690
      %1703 = vmatprep.subr.mxu0 0.0
      %1704 = vmatpush1.msra.mxu0 0.0
      %1705 = vmatprep.subr.mxu0 0.0
      %1706 = vmatpush1.msra.mxu0 0.0
      %1707 = vmatprep.subr.mxu0 0.0
      %1708 = vmatpush1.msra.mxu0 0.0
      %1709 = vmatprep.subr.mxu0 0.0
      %1710 = vmatpush1.msra.mxu0 0.0
      %1711 = vmatprep.subr.mxu0 0.0
      %1712 = vmatpush1.msra.mxu0 0.0
      %1713 = vmatprep.subr.mxu0 0.0
      %1714 = vmatpush1.msra.mxu0 0.0
      %1715 = vmatprep.subr.mxu0 0.0
      %1716 = vmatpush1.msra.mxu0 0.0
      %1717 = vmatprep.subr.mxu0 0.0
      %1718 = vmatpush1.msra.mxu0 0.0
      %1719 = vmatprep.subr.mxu0 0.0
      %1720 = vmatpush1.msra.mxu0 0.0
      %1721 = vmatprep.subr.mxu0 0.0
      %1722 = vmatpush1.msra.mxu0 0.0
      %1723 = vmatprep.subr.mxu0 0.0
      %1724 = vmatpush1.msra.mxu0 0.0
      %1725 = vmatprep.subr.mxu0 0.0
      %1726 = vmatpush1.msra.mxu0 0.0
      %1727 = vmatprep.subr.mxu0 0.0
      %1728 = vmatpush1.msra.mxu0 0.0
      %1729 = vmatprep.subr.mxu0 0.0
      %1730 = vmatpush1.msra.mxu0 0.0
      %1731 = vmatprep.subr.mxu0 0.0
      %1732 = vmatpush1.msra.mxu0 0.0
      %1733 = vmatprep.subr.mxu0 0.0
      %1734 = vmatpush1.msra.mxu0 0.0
      %1735 = vmatprep.subr.mxu0 0.0
      %1736 = vmatpush1.msra.mxu0 0.0
      %1737 = vmatprep.subr.mxu0 0.0
      %1738 = vmatpush1.msra.mxu0 0.0
      %1739 = vmatprep.subr.mxu0 0.0
      %1740 = vmatpush1.msra.mxu0 0.0
      %1741 = vmatprep.subr.mxu0 0.0
      %1742 = vmatpush1.msra.mxu0 0.0
      %1743 = vmatprep.subr.mxu0 0.0
      %1744 = vmatpush1.msra.mxu0 0.0
      %1745 = vmatprep.subr.mxu0 0.0
      %1746 = vmatpush1.msra.mxu0 0.0
      %1747 = vmatprep.subr.mxu0 0.0
      %1748 = vmatpush1.msra.mxu0 0.0
      %1749 = vmatprep.subr.mxu0 0.0
      %1750 = vmatpush1.msra.mxu0 0.0
      %1751 = vmatprep.subr.mxu0 0.0
      %1752 = vmatpush1.msra.mxu0 0.0
      %1753 = vmatprep.subr.mxu0 0.0
      %1754 = vmatpush1.msra.mxu0 0.0
      %1755 = vmatprep.subr.mxu0 0.0
      %1756 = vmatpush1.msra.mxu0 0.0
      %1757 = vmatprep.subr.mxu0 0.0
      %1758 = vmatpush1.msra.mxu0 0.0
      %1759 = vmatprep.subr.mxu0 0.0
      %1760 = vmatpush1.msra.mxu0 0.0
      %1761 = vmatprep.subr.mxu0 0.0
      %1762 = vmatpush1.msra.mxu0 0.0
      %1763 = vmatprep.mubr.f32.mxu0 0.0
      %1764 = vmatmul.mubr.f32.gmra.mrb[0].mxu0 %v1694
      %v1765 = vpop.f32.mrb[0].mxu0
      %v1766 = vadd.f32 0.0, %v1765
      %v1767 = vpop.f32.mrb[0].mxu0
      %1768 = vmatprep.mubr.f32.mxu0 0.0
      %1769 = vmatmul.mubr.f32.gmra.mrb[0].mxu0 %v1697
      %v1770 = vpop.f32.mrb[0].mxu0
      %v1771 = vadd.f32 0.0, %v1770
      %v1772 = vpop.f32.mrb[0].mxu0
      %1773 = vdwg.mxu0
      %v1774 = vpack.c.bf16 %v1771, %v1766
      %v1775 = vld [vmem:[%s7 + $0xc] sm:$0xf]
      %v1777 = vsel %vm822, %v1774, 0
      %v1780 = vsel %vm1227, %v1775, 0
      %1782 = vmatprep.subr.bf16.mxu0 0
      %1783 = vmatpush1.bf16.msra.mxu0 %v1780
      %1784 = vmatprep.subr.bf16.mxu0 0
      %1785 = vmatpush1.bf16.msra.mxu0 0
      %1786 = vmatprep.subr.bf16.mxu0 0
      %1787 = vmatpush1.bf16.msra.mxu0 0
      %1788 = vmatprep.subr.bf16.mxu0 0
      %1789 = vmatpush1.bf16.msra.mxu0 0
      %1790 = vmatprep.subr.bf16.mxu0 0
      %1791 = vmatpush1.bf16.msra.mxu0 0
      %1792 = vmatprep.subr.bf16.mxu0 0
      %1793 = vmatpush1.bf16.msra.mxu0 0
      %1794 = vmatprep.subr.bf16.mxu0 0
      %1795 = vmatpush1.bf16.msra.mxu0 0
      %1796 = vmatprep.subr.bf16.mxu0 0
      %1797 = vmatpush1.bf16.msra.mxu0 0
      %1798 = vmatprep.subr.bf16.mxu0 0
      %1799 = vmatpush1.bf16.msra.mxu0 0
      %1800 = vmatprep.subr.bf16.mxu0 0
      %1801 = vmatpush1.bf16.msra.mxu0 0
      %1802 = vmatprep.subr.bf16.mxu0 0
      %1803 = vmatpush1.bf16.msra.mxu0 0
      %1804 = vmatprep.subr.bf16.mxu0 0
      %1805 = vmatpush1.bf16.msra.mxu0 0
      %1806 = vmatprep.subr.bf16.mxu0 0
      %1807 = vmatpush1.bf16.msra.mxu0 0
      %1808 = vmatprep.subr.bf16.mxu0 0
      %1809 = vmatpush1.bf16.msra.mxu0 0
      %1810 = vmatprep.subr.bf16.mxu0 0
      %1811 = vmatpush1.bf16.msra.mxu0 0
      %1812 = vmatprep.subr.bf16.mxu0 0
      %1813 = vmatpush1.bf16.msra.mxu0 0
      %1814 = vmatprep.mubr.bf16.mxu0 0
      %1815 = vmatmul.mubr.bf16.gmra.mrb[0].mxu0 %v1777
      %v1816 = vpop.f32.mrb[0].mxu0
      %v1817 = vadd.f32 0.0, %v1816
      %v1818 = vpop.f32.mrb[0].mxu0
      %v1819 = vpop.f32.mrb[0].mxu0
      %v1820 = vadd.f32 0.0, %v1819
      %v1821 = vpop.f32.mrb[0].mxu0
      %1822 = vdwg.mxu0
      %v1823 = vadd.f32 %v1570, %v1817
      %v1824 = vadd.f32 %v1571, %v1820
      %v1825 = vadd.f32 %v696, %v1823
      %v1826 = vadd.f32 %v699, %v1824
      %v1827 = vld [vmem:[%s8] sm:$0x1]
      %v1829 = vlaneseq
      %v1830 = vshrl.u32 %v1829, 7
      %v1831 = vsub.s32 0, %v1830
      %v1832 = vrot.slane %v1827, %v1831
      %v1834 = vadd.f32 %v1825, %v1832
      %v1835 = vadd.f32 %v1826, %v1832
      %v1836 = vld [vmem:[%s9] sm:$0x1]
      %v1837 = vld [vmem:[%s10] sm:$0x1]
      %v1838 = vsel %vm704, %v1834, 0.0
      %1839 = vadd.xlane.f32.xlu0 %v1838
      %v1840 = vpop.xlane.xlu0 %1839
      %v1841 = vsel %vm704, %v1835, 0.0
      %1842 = vadd.xlane.f32.xlu0 %v1841
      %v1843 = vpop.xlane.xlu0 %1842
      %v1844 = vmul.f32 %v1840, %v711
      %v1845 = vmul.f32 %v1843, %v711
      %v1846 = vsub.f32 %v1834, %v1844
      %v1847 = vsub.f32 %v1835, %v1845
      %v1848 = vmul.f32 %v1846, %v1846
      %v1849 = vmul.f32 %v1847, %v1847
      %v1850 = vsel %vm704, %v1848, 0.0
      %1851 = vadd.xlane.f32.xlu0 %v1850
      %v1852 = vpop.xlane.xlu0 %1851
      %v1853 = vsel %vm704, %v1849, 0.0
      %1854 = vadd.xlane.f32.xlu0 %v1853
      %v1855 = vpop.xlane.xlu0 %1854
      %v1856 = vmul.f32 %v1852, %v711
      %v1857 = vmul.f32 %v1855, %v711
      %v1858 = vadd.f32 %v1856, 1e-05
      %v1859 = vadd.f32 %v1857, 1e-05
      %v1860 = vrsqrt.pop %v1858
      %v1861 = vrsqrt.pop %v1859
      %v1862 = vmul.f32 %v1846, %v1860
      %v1863 = vmul.f32 %v1847, %v1861
      %v1865 = vlaneseq
      %v1866 = vshrl.u32 %v1865, 7
      %v1867 = vsub.s32 0, %v1866
      %v1868 = vrot.slane %v1836, %v1867
      %v1870 = vmul.f32 %v1862, %v1868
      %v1871 = vmul.f32 %v1863, %v1868
      %v1873 = vlaneseq
      %v1874 = vshrl.u32 %v1873, 7
      %v1875 = vsub.s32 0, %v1874
      %v1876 = vrot.slane %v1837, %v1875
      %v1878 = vadd.f32 %v1870, %v1876
      %v1879 = vadd.f32 %v1871, %v1876
      %v1880 = vpack.c.bf16 %v1879, %v1878
      %v1881 = vld [vmem:[%s11] sm:$0xf]
      %v1882 = vld [vmem:[%s11 + $0x4] sm:$0xf]
      %v1883 = vld [vmem:[%s11 + $0x8] sm:$0xf]
      %v1884 = vld [vmem:[%s11 + $0xc] sm:$0xf]
      %v1885 = vld [vmem:[%s12] sm:$0x1]
      %v1887 = vlaneseq
      %v1888 = vshrl.u32 %v1887, 7
      %v1889 = vsub.s32 0, %v1888
      %v1890 = vrot.slane %v1885, %v1889
      %v1896 = vunpack.c.l.b16 %v1881
      %v1897 = vunpack.c.l.b16 %v1882
      %v1898 = vunpack.c.l.b16 %v1883
      %v1899 = vunpack.c.l.b16 %v1884
      %v1900 = vpack.c.b16 %v1897, %v1896
      %v1901 = vpack.c.b16 %v1899, %v1898
      %v1905 = vsel %vm704, %v1880, 0
      %1907 = vmatprep.subr.bf16.mxu0 0
      %1908 = vmatpush1.bf16.msra.mxu0 %v1900
      %1909 = vmatprep.subr.bf16.mxu0 0
      %1910 = vmatpush1.bf16.msra.mxu0 %v1901
      %1911 = vmatprep.subr.bf16.mxu0 0
      %1912 = vmatpush1.bf16.msra.mxu0 0
      %1913 = vmatprep.subr.bf16.mxu0 0
      %1914 = vmatpush1.bf16.msra.mxu0 0
      %1915 = vmatprep.subr.bf16.mxu0 0
      %1916 = vmatpush1.bf16.msra.mxu0 0
      %1917 = vmatprep.subr.bf16.mxu0 0
      %1918 = vmatpush1.bf16.msra.mxu0 0
      %1919 = vmatprep.subr.bf16.mxu0 0
      %1920 = vmatpush1.bf16.msra.mxu0 0
      %1921 = vmatprep.subr.bf16.mxu0 0
      %1922 = vmatpush1.bf16.msra.mxu0 0
      %1923 = vmatprep.subr.bf16.mxu0 0
      %1924 = vmatpush1.bf16.msra.mxu0 0
      %1925 = vmatprep.subr.bf16.mxu0 0
      %1926 = vmatpush1.bf16.msra.mxu0 0
      %1927 = vmatprep.subr.bf16.mxu0 0
      %1928 = vmatpush1.bf16.msra.mxu0 0
      %1929 = vmatprep.subr.bf16.mxu0 0
      %1930 = vmatpush1.bf16.msra.mxu0 0
      %1931 = vmatprep.subr.bf16.mxu0 0
      %1932 = vmatpush1.bf16.msra.mxu0 0
      %1933 = vmatprep.subr.bf16.mxu0 0
      %1934 = vmatpush1.bf16.msra.mxu0 0
      %1935 = vmatprep.subr.bf16.mxu0 0
      %1936 = vmatpush1.bf16.msra.mxu0 0
      %1937 = vmatprep.subr.bf16.mxu0 0
      %1938 = vmatpush1.bf16.msra.mxu0 0
      %1939 = vmatprep.mubr.bf16.mxu0 0
      %1940 = vmatmul.mubr.bf16.gmra.mrb[0].mxu0 %v1905
      %v1941 = vpop.f32.mrb[0].mxu0
      %v1942 = vadd.f32 %v1890, %v1941
      %v1943 = vpop.f32.mrb[0].mxu0
      %v1944 = vpop.f32.mrb[0].mxu0
      %v1945 = vadd.f32 %v1890, %v1944
      %v1946 = vpop.f32.mrb[0].mxu0
      %1947 = vdwg.mxu0
      %v1948 = vmul.f32 %v1942, %v1942
      %v1949 = vmul.f32 %v1945, %v1945
      %v1950 = vmul.f32 %v1942, %v1948
      %v1951 = vmul.f32 %v1945, %v1949
      %v1952 = vmul.f32 %v1950, 0.044715
      %v1953 = vmul.f32 %v1951, 0.044715
      %v1954 = vadd.f32 %v1942, %v1952
      %v1955 = vadd.f32 %v1945, %v1953
      %v1956 = vmul.f32 %v1954, 0.7978846
      %v1957 = vmul.f32 %v1955, 0.7978846
      %v1958 = vtanh.pop %v1956
      %v1959 = vtanh.pop %v1957
      %v1960 = vadd.f32 %v1958, 1.0
      %v1961 = vadd.f32 %v1959, 1.0
      %v1962 = vmul.f32 %v1960, 0.5
      %v1963 = vmul.f32 %v1961, 0.5
      %v1964 = vmul.f32 %v1942, %v1962
      %v1965 = vmul.f32 %v1945, %v1963
      %v1966 = vpack.c.bf16 %v1965, %v1964
      %v1967 = vld [vmem:[%s13] sm:$0xf]
      %v1968 = vld [vmem:[%s13 + $0x4] sm:$0xf]
      %v1969 = vld [vmem:[%s13 + $0x8] sm:$0xf]
      %v1970 = vld [vmem:[%s13 + $0xc] sm:$0xf]
      %v1971 = vld [vmem:[%s13 + $0x10] sm:$0xf]
      %v1972 = vld [vmem:[%s13 + $0x14] sm:$0xf]
      %v1973 = vld [vmem:[%s13 + $0x18] sm:$0xf]
      %v1974 = vld [vmem:[%s13 + $0x1c] sm:$0xf]
      %v1975 = vld [vmem:[%s13 + $0x20] sm:$0xf]
      %v1976 = vld [vmem:[%s13 + $0x24] sm:$0xf]
      %v1977 = vld [vmem:[%s13 + $0x28] sm:$0xf]
      %v1978 = vld [vmem:[%s13 + $0x2c] sm:$0xf]
      %v1979 = vld [vmem:[%s13 + $0x30] sm:$0xf]
      %v1980 = vld [vmem:[%s13 + $0x34] sm:$0xf]
      %v1981 = vld [vmem:[%s13 + $0x38] sm:$0xf]
      %v1982 = vld [vmem:[%s13 + $0x3c] sm:$0xf]
      %v1983 = vld [vmem:[%s14] sm:$0x1]
      %v1985 = vlaneseq
      %v1986 = vshrl.u32 %v1985, 7
      %v1987 = vsub.s32 0, %v1986
      %v1988 = vrot.slane %v1983, %v1987
      %v2006 = vunpack.c.l.b16 %v1967
      %v2007 = vunpack.c.l.b16 %v1968
      %v2008 = vunpack.c.l.b16 %v1969
      %v2009 = vunpack.c.l.b16 %v1970
      %v2010 = vunpack.c.l.b16 %v1971
      %v2011 = vunpack.c.l.b16 %v1972
      %v2012 = vunpack.c.l.b16 %v1973
      %v2013 = vunpack.c.l.b16 %v1974
      %v2014 = vunpack.c.l.b16 %v1975
      %v2015 = vunpack.c.l.b16 %v1976
      %v2016 = vunpack.c.l.b16 %v1977
      %v2017 = vunpack.c.l.b16 %v1978
      %v2018 = vunpack.c.l.b16 %v1979
      %v2019 = vunpack.c.l.b16 %v1980
      %v2020 = vunpack.c.l.b16 %v1981
      %v2021 = vunpack.c.l.b16 %v1982
      %v2022 = vpack.c.b16 %v2007, %v2006
      %v2023 = vpack.c.b16 %v2009, %v2008
      %v2024 = vpack.c.b16 %v2011, %v2010
      %v2025 = vpack.c.b16 %v2013, %v2012
      %v2026 = vpack.c.b16 %v2015, %v2014
      %v2027 = vpack.c.b16 %v2017, %v2016
      %v2028 = vpack.c.b16 %v2019, %v2018
      %v2029 = vpack.c.b16 %v2021, %v2020
      %2038 = vmatprep.subr.bf16.mxu0 0
      %2039 = vmatpush1.bf16.msra.mxu0 %v2022
      %2040 = vmatprep.subr.bf16.mxu0 0
      %2041 = vmatpush1.bf16.msra.mxu0 %v2023
      %2042 = vmatprep.subr.bf16.mxu0 0
      %2043 = vmatpush1.bf16.msra.mxu0 %v2024
      %2044 = vmatprep.subr.bf16.mxu0 0
      %2045 = vmatpush1.bf16.msra.mxu0 %v2025
      %2046 = vmatprep.subr.bf16.mxu0 0
      %2047 = vmatpush1.bf16.msra.mxu0 %v2026
      %2048 = vmatprep.subr.bf16.mxu0 0
      %2049 = vmatpush1.bf16.msra.mxu0 %v2027
      %2050 = vmatprep.subr.bf16.mxu0 0
      %2051 = vmatpush1.bf16.msra.mxu0 %v2028
      %2052 = vmatprep.subr.bf16.mxu0 0
      %2053 = vmatpush1.bf16.msra.mxu0 %v2029
      %2054 = vmatprep.subr.bf16.mxu0 0
      %2055 = vmatpush1.bf16.msra.mxu0 0
      %2056 = vmatprep.subr.bf16.mxu0 0
      %2057 = vmatpush1.bf16.msra.mxu0 0
      %2058 = vmatprep.subr.bf16.mxu0 0
      %2059 = vmatpush1.bf16.msra.mxu0 0
      %2060 = vmatprep.subr.bf16.mxu0 0
      %2061 = vmatpush1.bf16.msra.mxu0 0
      %2062 = vmatprep.subr.bf16.mxu0 0
      %2063 = vmatpush1.bf16.msra.mxu0 0
      %2064 = vmatprep.subr.bf16.mxu0 0
      %2065 = vmatpush1.bf16.msra.mxu0 0
      %2066 = vmatprep.subr.bf16.mxu0 0
      %2067 = vmatpush1.bf16.msra.mxu0 0
      %2068 = vmatprep.subr.bf16.mxu0 0
      %2069 = vmatpush1.bf16.msra.mxu0 0
      %2070 = vmatprep.mubr.bf16.mxu0 0
      %2071 = vmatmul.mubr.bf16.gmra.mrb[0].mxu0 %v1966
      %v2072 = vpop.f32.mrb[0].mxu0
      %v2073 = vadd.f32 %v1988, %v2072
      %v2074 = vpop.f32.mrb[0].mxu0
      %v2075 = vpop.f32.mrb[0].mxu0
      %v2076 = vadd.f32 %v1988, %v2075
      %v2077 = vpop.f32.mrb[0].mxu0
      %2078 = vdwg.mxu0
      %v2079 = vadd.f32 %v1834, %v2073
      %v2080 = vadd.f32 %v1835, %v2076
      %v2081 = vld [vmem:[%s15] sm:$0x1]
      %v2082 = vld [vmem:[#allocation2] sm:$0x1]
      %2084 = vset.pattern.permute.xlu0 0
      %2085 = vperm.xlu0 %2084, %v2082
      %v2086 = vpop.permute.xlu0 %2085
      %v2088 = vlaneseq
      %v2089 = vshrl.u32 %v2088, 7
      %v2090 = vsub.s32 0, %v2089
      %v2091 = vrot.slane %v2086, %v2090
      %v2093 = vsel %vm704, %v2081, 0
      %v2096 = vsel %vm704, %v2079, 0
      %v2099 = vsel %vm704, %v2080, 0
      %2101 = vmatprep.subr.mxu0 0.0
      %2102 = vmatpush1.xpose.msra.mxu0 %v2096
      %2103 = vmatprep.subr.mxu0 0.0
      %2104 = vmatpush1.xpose.msra.mxu0 %v2099
      %2105 = vmatprep.subr.mxu0 0.0
      %2106 = vmatpush1.xpose.msra.mxu0 0.0
      %2107 = vmatprep.subr.mxu0 0.0
      %2108 = vmatpush1.xpose.msra.mxu0 0.0
      %2109 = vmatprep.subr.mxu0 0.0
      %2110 = vmatpush1.xpose.msra.mxu0 0.0
      %2111 = vmatprep.subr.mxu0 0.0
      %2112 = vmatpush1.xpose.msra.mxu0 0.0
      %2113 = vmatprep.subr.mxu0 0.0
      %2114 = vmatpush1.xpose.msra.mxu0 0.0
      %2115 = vmatprep.subr.mxu0 0.0
      %2116 = vmatpush1.xpose.msra.mxu0 0.0
      %2117 = vmatprep.subr.mxu0 0.0
      %2118 = vmatpush1.xpose.msra.mxu0 0.0
      %2119 = vmatprep.subr.mxu0 0.0
      %2120 = vmatpush1.xpose.msra.mxu0 0.0
      %2121 = vmatprep.subr.mxu0 0.0
      %2122 = vmatpush1.xpose.msra.mxu0 0.0
      %2123 = vmatprep.subr.mxu0 0.0
      %2124 = vmatpush1.xpose.msra.mxu0 0.0
      %2125 = vmatprep.subr.mxu0 0.0
      %2126 = vmatpush1.xpose.msra.mxu0 0.0
      %2127 = vmatprep.subr.mxu0 0.0
      %2128 = vmatpush1.xpose.msra.mxu0 0.0
      %2129 = vmatprep.subr.mxu0 0.0
      %2130 = vmatpush1.xpose.msra.mxu0 0.0
      %2131 = vmatprep.subr.mxu0 0.0
      %2132 = vmatpush1.xpose.msra.mxu0 0.0
      %2133 = vmatprep.subr.mxu0 0.0
      %2134 = vmatpush1.xpose.msra.mxu0 0.0
      %2135 = vmatprep.subr.mxu0 0.0
      %2136 = vmatpush1.xpose.msra.mxu0 0.0
      %2137 = vmatprep.subr.mxu0 0.0
      %2138 = vmatpush1.xpose.msra.mxu0 0.0
      %2139 = vmatprep.subr.mxu0 0.0
      %2140 = vmatpush1.xpose.msra.mxu0 0.0
      %2141 = vmatprep.subr.mxu0 0.0
      %2142 = vmatpush1.xpose.msra.mxu0 0.0
      %2143 = vmatprep.subr.mxu0 0.0
      %2144 = vmatpush1.xpose.msra.mxu0 0.0
      %2145 = vmatprep.subr.mxu0 0.0
      %2146 = vmatpush1.xpose.msra.mxu0 0.0
      %2147 = vmatprep.subr.mxu0 0.0
      %2148 = vmatpush1.xpose.msra.mxu0 0.0
      %2149 = vmatprep.subr.mxu0 0.0
      %2150 = vmatpush1.xpose.msra.mxu0 0.0
      %2151 = vmatprep.subr.mxu0 0.0
      %2152 = vmatpush1.xpose.msra.mxu0 0.0
      %2153 = vmatprep.subr.mxu0 0.0
      %2154 = vmatpush1.xpose.msra.mxu0 0.0
      %2155 = vmatprep.subr.mxu0 0.0
      %2156 = vmatpush1.xpose.msra.mxu0 0.0
      %2157 = vmatprep.subr.mxu0 0.0
      %2158 = vmatpush1.xpose.msra.mxu0 0.0
      %2159 = vmatprep.subr.mxu0 0.0
      %2160 = vmatpush1.xpose.msra.mxu0 0.0
      %2161 = vmatprep.subr.mxu0 0.0
      %2162 = vmatpush1.xpose.msra.mxu0 0.0
      %2163 = vmatprep.subr.mxu0 0.0
      %2164 = vmatpush1.xpose.msra.mxu0 0.0
      %2165 = vmatprep.mubr.f32.mxu0 0.0
      %2166 = vmatmul.mubr.f32.gmra.mrb[0].mxu0 %v2093
      %v2167 = vpop.f32.mrb[0].mxu0
      %v2168 = vadd.f32 %v2091, %v2167
      %v2169 = vpop.f32.mrb[0].mxu0
      %2170 = vdwg.mxu0
      %vm2171 = vcmask 122880
      %2172 = vst.msk [vmem:[%s546] sm:$0x1] %vm2171, %v2168
      %p2173 = scmp.lt.s32.totalorder %s30, 1
      %s2174 = scalar_select %p2173, %s30, 1
      %s2175 = scalar_lea.vmem %s17, %s2174
      // Predicated region
      $region89: #{forward.1} parent=87 // pred_check
        %p2176 = pneg %p410
      $region90: #{forward.1} parent=87 // pred_check_branch
        %2178 = sbr.rel (%p2176) target = $region92
      $region91: #{forward.1} parent=87 // pred_region
        _
      $region92: #{forward.1} parent=87 // pred_fallthru
        _
    $region88: #{forward.1} parent=5 // pred_fallthru
      _
    %p2179 = scmp.le.s32.totalorder 2, %s25
    // Predicated region
    $region93: #{forward.1} parent=5 // pred_check
      %p2180 = pneg %p2179
    $region94: #{forward.1} parent=5 // pred_check_branch
      %2182 = sbr.rel (%p2180) target = $region96
    $region95: #{forward.1} parent=5 // pred_region
      %s2183 = ssub.s32 %s25, 2
      // Predicated region
      $region97: #{forward.1} parent=95 // pred_check
        %p2184 = pneg %p416
      $region98: #{forward.1} parent=95 // pred_check_branch
        %2186 = sbr.rel (%p2184) target = $region100
      $region99: #{forward.1} parent=95 // pred_region
        %p2187 = scmp.lt.s32.totalorder %s31, 1
        %s2188 = scalar_select %p2187, %s31, 1
        %s2189 = scalar_lea.vmem %s17, %s2188
      $region100: #{forward.1} parent=95 // pred_fallthru
        _
    $region96: #{forward.1} parent=5 // pred_fallthru
      _
  $region6: #{forward.1} parent=0 // loop_footer
    %s29 = sadd.s32 1, %s25
  $region7: #{forward.1} parent=0 // loop_footer_branch
    %24 = sbr.rel target = $region3
  $region8: #{forward.1} parent=0 // loop_exit
    _

</llo_original>
